<compile_context>
chip_gen: v5e
topology: v5e:2x2
jax: 0.10.0
libtpu: 0.0.40
codegen_flags: <defaults>
</compile_context>

<pallas_src>
import functools

import jax
import jax.numpy as jnp
from jax import lax
from jax.experimental import pallas as pl
from jax.experimental.pallas import tpu as pltpu

BATCH_SIZE = 8   # small synthetic batch (module hardcodes 30; any value works here)
LANE = 128       # TPU lane width; hidden/class dims are zero-padded to a multiple
NEG_BIG = -1e30  # bias for padded class lanes -> exp() underflows to 0 in log_softmax


def _round_up(x, m):
    return (x + m - 1) // m * m


def _pick_chunk(T):
    """Largest power-of-two chunk (>=8) that divides T; else a single chunk."""
    for c in (128, 64, 32, 16, 8):
        if T % c == 0:
            return c
    return T


# ----------------------------------------------------------------------------
# Fused kernel body.  Grid = (num_chunks,), chunk axis is "arbitrary" (carries
# h/c across chunks in persistent VMEM scratch).  Gate order follows PyTorch:
# [i, f, g, o].  Padded hidden lanes provably stay zero (zero gate columns).
# ----------------------------------------------------------------------------
def _fused_forward_kernel(CHUNK, B, V, Hp, n_layers, unroll, *refs):
    idx = 0
    ids_ref = refs[idx]; idx += 1                       # (CHUNK*B, 1) int32 token ids
    proj_refs = refs[idx:idx + n_layers]; idx += n_layers   # bf16: l0 (V,4Hp); l>0 (Hp,4Hp)
    whh_refs = refs[idx:idx + n_layers]; idx += n_layers    # bf16 (Hp, 4Hp)
    b_refs = refs[idx:idx + n_layers]; idx += n_layers      # f32 (1, 4Hp)  (b_ih + b_hh)
    wout_ref = refs[idx]; idx += 1                      # bf16 (Hp, Cp)
    bout_ref = refs[idx]; idx += 1                      # f32 (1, Cp), padded lanes -1e30
    out_ref = refs[idx]; idx += 1                       # f32 (B, Cp)
    xproj_scr = refs[idx]; idx += 1                     # f32 (CHUNK, B, 4Hp)
    h_carry = refs[idx]; idx += 1                       # f32 (n_layers, B, Hp)
    c_carry = refs[idx]; idx += 1                       # f32 (n_layers, B, Hp)
    hseq_scr = refs[idx] if n_layers > 1 else None      # bf16 (CHUNK, B, Hp)

    k = pl.program_id(0)

    @pl.when(k == 0)
    def _():
        h_carry[...] = jnp.zeros_like(h_carry)
        c_carry[...] = jnp.zeros_like(c_carry)

    CB = CHUNK * B

    # Embedding folded into the layer-0 input projection: one-hot(ids) @ (Emb @ W_ih^T).
    # Exact for in-range ids (out-of-range ids silently map to a zero row).
    # For non-toy vocabularies a row gather would be cheaper; V here is a character set.
    ids = ids_ref[...]                                                  # (CB, 1)
    onehot = (ids == lax.broadcasted_iota(jnp.int32, (CB, V), 1)).astype(jnp.bfloat16)

    layer_in = onehot                                                   # (CB, V) bf16
    h_last = None
    for l in range(n_layers):
        # Batched input projection for the whole chunk (bias folded in), hoisted
        # out of the sequential recurrence.
        xproj_scr[...] = (
            jnp.dot(layer_in, proj_refs[l][...], preferred_element_type=jnp.float32)
            + b_refs[l][...]).reshape(CHUNK, B, 4 * Hp)

        # Load the recurrent weight ONCE per chunk/layer (bf16 -> half the streaming).
        whh = whh_refs[l][...]
        write_seq = l < n_layers - 1

        def step(t, carry, whh=whh, write_seq=write_seq):
            h, c = carry                                                # f32 (B, Hp)
            gates = xproj_scr[t] + jnp.dot(
                h.astype(jnp.bfloat16), whh, preferred_element_type=jnp.float32)
            i_g = jax.nn.sigmoid(gates[:, 0 * Hp:1 * Hp])
            f_g = jax.nn.sigmoid(gates[:, 1 * Hp:2 * Hp])
            g_g = jnp.tanh(gates[:, 2 * Hp:3 * Hp])
            o_g = jax.nn.sigmoid(gates[:, 3 * Hp:4 * Hp])
            c = f_g * c + i_g * g_g
            h = o_g * jnp.tanh(c)
            if write_seq:   # inter-layer sequence stays in VMEM (never goes to HBM)
                hseq_scr[t] = h.astype(jnp.bfloat16)
            return h, c

        h_l, c_l = lax.fori_loop(0, CHUNK, step, (h_carry[l], c_carry[l]),
                                 unroll=unroll)
        h_carry[l] = h_l
        c_carry[l] = c_l
        h_last = h_l

        if write_seq:
            layer_in = hseq_scr[...].reshape(CB, Hp)                    # bf16

    # Head (only on the last chunk): Linear + log_softmax.
    # Padded class lanes carry bias -1e30 -> exp() underflows to 0.
    @pl.when(k == pl.num_programs(0) - 1)
    def _():
        logits = (jnp.dot(h_last.astype(jnp.bfloat16), wout_ref[...],
                          preferred_element_type=jnp.float32)
                  + bout_ref[...])                                      # (B, Cp) f32
        m = jnp.max(logits, axis=1, keepdims=True)
        z = logits - m
        out_ref[...] = z - jnp.log(jnp.sum(jnp.exp(z), axis=1, keepdims=True))


def _fused_forward(ids, proj_list, whh_list, b_list, wout, bout,
                   *, T, B, V, Hp, Cp, n_layers):
    CHUNK = _pick_chunk(T)
    n_chunks = T // CHUNK
    unroll = max(1, min(CHUNK, 8))

    kernel = functools.partial(_fused_forward_kernel, CHUNK, B, V, Hp, n_layers, unroll)

    in_arrays = [ids, *proj_list, *whh_list, *b_list, wout, bout]
    in_specs = [pl.BlockSpec((CHUNK * B, 1), lambda k: (k, 0))]         # ids chunk
    for a in in_arrays[1:]:
        # Whole-array weight blocks with a constant index map -> DMA'd once, resident.
        in_specs.append(pl.BlockSpec(a.shape, lambda k: (0, 0)))

    scratch = [
        pltpu.VMEM((CHUNK, B, 4 * Hp), jnp.float32),    # per-chunk gate preactivations
        pltpu.VMEM((n_layers, B, Hp), jnp.float32),     # h carry (persists across chunks)
        pltpu.VMEM((n_layers, B, Hp), jnp.float32),     # c carry
    ]
    if n_layers > 1:
        scratch.append(pltpu.VMEM((CHUNK, B, Hp), jnp.bfloat16))  # inter-layer h seq

    def _nbytes(a):
        return int(a.size) * a.dtype.itemsize

    weight_bytes = sum(_nbytes(a) for a in in_arrays[1:])
    block_bytes = CHUNK * B * 4 + B * Cp * 4
    scratch_bytes = (CHUNK * B * 4 * Hp * 4
                     + 2 * n_layers * B * Hp * 4
                     + (CHUNK * B * Hp * 2 if n_layers > 1 else 0))
    needed = 2 * (weight_bytes + block_bytes) + scratch_bytes
    vmem_limit = int(min(max(needed + (8 << 20), 32 << 20), 64 << 20))

    return pl.pallas_call(
        kernel,
        out_shape=jax.ShapeDtypeStruct((B, Cp), jnp.float32),
        grid_spec=pltpu.PrefetchScalarGridSpec(
            num_scalar_prefetch=0,
            grid=(n_chunks,),
            in_specs=in_specs,
            out_specs=pl.BlockSpec((B, Cp), lambda k: (0, 0)),
            scratch_shapes=scratch),
        compiler_params=pltpu.CompilerParams(
            dimension_semantics=("arbitrary",),
            vmem_limit_bytes=vmem_limit),
    )(*in_arrays)


# ----------------------------------------------------------------------------
# Model: parameters initialized deterministically in-script (PyTorch-like init).
# Padded / transposed / pre-composed / bf16 kernel weights built once at __init__.
# ----------------------------------------------------------------------------
class LSTMModelPallas:
    def __init__(self, embedding_dim, character_set_size, n_layers, hidden_dim,
                 n_classes, key):
        self.embedding_dim = embedding_dim
        self.character_set_size = character_set_size
        self.n_layers = n_layers
        self.hidden_dim = hidden_dim
        self.n_classes = n_classes
        self.Hp = _round_up(hidden_dim, LANE)
        self.Cp = _round_up(n_classes, LANE)

        k_emb, k_lstm, k_lin = jax.random.split(key, 3)

        # nn.Embedding: N(0, 1)
        self.embedding = jax.random.normal(
            k_emb, (character_set_size, embedding_dim), dtype=jnp.float32)

        # nn.LSTM: U(-1/sqrt(H), 1/sqrt(H)) per parameter
        bound = 1.0 / jnp.sqrt(jnp.float32(hidden_dim))
        self.w_ih, self.w_hh, self.b_ih, self.b_hh = [], [], [], []
        lkeys = jax.random.split(k_lstm, 4 * n_layers)
        for l in range(n_layers):
            in_dim = embedding_dim if l == 0 else hidden_dim
            k0, k1, k2, k3 = lkeys[4 * l: 4 * l + 4]
            self.w_ih.append(jax.random.uniform(
                k0, (4 * hidden_dim, in_dim), jnp.float32, -bound, bound))
            self.w_hh.append(jax.random.uniform(
                k1, (4 * hidden_dim, hidden_dim), jnp.float32, -bound, bound))
            self.b_ih.append(jax.random.uniform(
                k2, (4 * hidden_dim,), jnp.float32, -bound, bound))
            self.b_hh.append(jax.random.uniform(
                k3, (4 * hidden_dim,), jnp.float32, -bound, bound))

        # nn.Linear(hidden_dim, n_classes): U(-1/sqrt(H), 1/sqrt(H))
        kw, kb = jax.random.split(k_lin)
        self.w_out = jax.random.uniform(
            kw, (n_classes, hidden_dim), jnp.float32, -bound, bound)
        self.b_out = jax.random.uniform(
            kb, (n_classes,), jnp.float32, -bound, bound)

        # ---- precompute padded, bf16, lane-dense kernel-side weights (one-time) ----
        H, Hp, C, Cp = hidden_dim, self.Hp, n_classes, self.Cp

        def pad_gate_cols(w):   # (X, 4H) -> (X, 4Hp), zero-pad each gate block
            X = w.shape[0]
            return jnp.pad(w.reshape(X, 4, H),
                           ((0, 0), (0, 0), (0, Hp - H))).reshape(X, 4 * Hp)

        self.proj_p, self.whh_p, self.b_p = [], [], []
        for l in range(n_layers):
            wih_t = jnp.transpose(self.w_ih[l])                          # (in_dim, 4H)
            if l == 0:
                proj = pad_gate_cols(self.embedding @ wih_t)             # (V, 4Hp)
            else:
                proj = jnp.pad(pad_gate_cols(wih_t), ((0, Hp - H), (0, 0)))  # (Hp, 4Hp)
            whh = jnp.pad(pad_gate_cols(jnp.transpose(self.w_hh[l])),
                          ((0, Hp - H), (0, 0)))                         # (Hp, 4Hp)
            bias = pad_gate_cols((self.b_ih[l] + self.b_hh[l]).reshape(1, 4 * H))
            self.proj_p.append(proj.astype(jnp.bfloat16))                # MXU operand
            self.whh_p.append(whh.astype(jnp.bfloat16))                  # MXU operand
            self.b_p.append(bias)                                        # f32

        self.wout_p = jnp.pad(jnp.transpose(self.w_out),
                              ((0, Hp - H), (0, Cp - C))).astype(jnp.bfloat16)
        self.bout_p = jnp.pad(self.b_out.reshape(1, C), ((0, 0), (0, Cp - C)),
                              constant_values=NEG_BIG)                   # f32 (1, Cp)

    def __call__(self, inputs):
        # inputs: (seq_len, batch) int32 token ids (time-major, like nn.LSTM default)
        T, B = inputs.shape
        ids = inputs.astype(jnp.int32).reshape(T * B, 1)   # layout plumbing (glue)
        out = _fused_forward(
            ids, self.proj_p, self.whh_p, self.b_p, self.wout_p, self.bout_p,
            T=T, B=B, V=self.character_set_size, Hp=self.Hp, Cp=self.Cp,
            n_layers=self.n_layers)
        # TODO(synk): original `hidden[0].view(BATCH_SIZE, -1)` is only shape-consistent
        # for n_layers == 1; we feed the last layer's final hidden (identical there).
        return out[:, :self.n_classes]


# ----------------------------------------------------------------------------
# Pure-JAX reference (same bf16 kernel weights), for a correctness check.
# ----------------------------------------------------------------------------
def _reference_forward(model, inputs):
    T, B = inputs.shape
    Hp = model.Hp
    ids = inputs.reshape(T * B)
    layer_in = jnp.asarray(model.proj_p[0], jnp.float32)[ids]            # (TB, 4Hp)
    h = None
    for l in range(model.n_layers):
        if l == 0:
            xproj = layer_in + model.b_p[0]
        else:
            xproj = layer_in @ jnp.asarray(model.proj_p[l], jnp.float32) + model.b_p[l]
        xproj = xproj.reshape(T, B, 4 * Hp)
        h = jnp.zeros((B, Hp), jnp.float32)
        c = jnp.zeros((B, Hp), jnp.float32)
        whh = jnp.asarray(model.whh_p[l], jnp.float32)
        hs = []
        for t in range(T):
            gates = xproj[t] + h @ whh
            i_g = jax.nn.sigmoid(gates[:, 0 * Hp:1 * Hp])
            f_g = jax.nn.sigmoid(gates[:, 1 * Hp:2 * Hp])
            g_g = jnp.tanh(gates[:, 2 * Hp:3 * Hp])
            o_g = jax.nn.sigmoid(gates[:, 3 * Hp:4 * Hp])
            c = f_g * c + i_g * g_g
            h = o_g * jnp.tanh(c)
            hs.append(h)
        layer_in = jnp.stack(hs).reshape(T * B, Hp)
    logits = h @ jnp.asarray(model.wout_p, jnp.float32) + model.bout_p
    return jax.nn.log_softmax(logits[:, :model.n_classes], axis=1)


if __name__ == "__main__":
    embedding_dim = 16
    character_set_size = 40
    n_layers = 1
    hidden_dim = 32
    n_classes = 5
    seq_len = 24          # -> 3 chunks of 8 timesteps (exercises the chunked grid)

    key = jax.random.PRNGKey(0)
    k_params, k_inputs = jax.random.split(key)

    model = LSTMModelPallas(embedding_dim, character_set_size, n_layers,
                            hidden_dim, n_classes, k_params)

    inputs = jax.random.randint(
        k_inputs, (seq_len, BATCH_SIZE), 0, character_set_size, dtype=jnp.int32)

    prob = model(inputs)
    jax.block_until_ready(prob)

    assert prob.shape == (BATCH_SIZE, n_classes)
    # log_softmax rows must exponentiate to 1 and be finite
    assert bool(jnp.all(jnp.isfinite(prob)))
    assert bool(jnp.allclose(jnp.sum(jnp.exp(prob), axis=1), 1.0, atol=1e-4))
    # Match a pure-JAX reference built from the same (bf16) weights
    ref = _reference_forward(model, inputs)
    assert bool(jnp.allclose(prob, ref, atol=5e-2)), "kernel/reference mismatch"
    print("KERNEL_OK")
</pallas_src>

<mosaic_0001>
module attributes {stable_mosaic.version = 11 : i64} {
  func.func @_fused_forward_kernel(%arg0: i32, %arg1: memref<64x1xi32, #tpu.memory_space<vmem>>, %arg2: memref<40x512xbf16, #tpu.memory_space<vmem>>, %arg3: memref<128x512xbf16, #tpu.memory_space<vmem>>, %arg4: memref<1x512xf32, #tpu.memory_space<vmem>>, %arg5: memref<128x128xbf16, #tpu.memory_space<vmem>>, %arg6: memref<1x128xf32, #tpu.memory_space<vmem>>, %arg7: memref<8x128xf32, #tpu.memory_space<vmem>>, %arg8: memref<8x8x512xf32, #tpu.memory_space<vmem>>, %arg9: memref<1x8x128xf32, #tpu.memory_space<vmem>>, %arg10: memref<1x8x128xf32, #tpu.memory_space<vmem>>) attributes {dimension_semantics = [#tpu.dimension_semantics<arbitrary>], iteration_bounds = array<i64: 3>, scalar_prefetch = 0 : i64, scratch_operands = 3 : i64, tpu.core_type = #tpu.core_type<tc>, window_params = [{transform_indices = @transform_0, window_bounds = array<i64: 64, 1>}, {pipeline_mode = #tpu.pipeline_mode<synchronous>, transform_indices = @transform_1, window_bounds = array<i64: 40, 512>}, {pipeline_mode = #tpu.pipeline_mode<synchronous>, transform_indices = @transform_2, window_bounds = array<i64: 128, 512>}, {pipeline_mode = #tpu.pipeline_mode<synchronous>, transform_indices = @transform_3, window_bounds = array<i64: 1, 512>}, {pipeline_mode = #tpu.pipeline_mode<synchronous>, transform_indices = @transform_4, window_bounds = array<i64: 128, 128>}, {pipeline_mode = #tpu.pipeline_mode<synchronous>, transform_indices = @transform_5, window_bounds = array<i64: 1, 128>}, {pipeline_mode = #tpu.pipeline_mode<synchronous>, transform_indices = @transform_6, window_bounds = array<i64: 8, 128>}]} {
    %c0_i32 = arith.constant 0 : i32
    %0 = arith.cmpi eq, %arg0, %c0_i32 : i32
    %1 = arith.extui %0 : i1 to i32
    %c0_i32_0 = arith.constant 0 : i32
    %2 = arith.cmpi ne, %1, %c0_i32_0 : i32
    scf.if %2 {
      %cst_74 = arith.constant 0.000000e+00 : f32
      %279 = vector.broadcast %cst_74 : f32 to vector<1x8x128xf32>
      %c0_75 = arith.constant 0 : index
      %c0_76 = arith.constant 0 : index
      %c0_77 = arith.constant 0 : index
      %280 = vector.load %arg9[%c0_75, %c0_76, %c0_77] : memref<1x8x128xf32, #tpu.memory_space<vmem>>, vector<1x8x128xf32>
      tpu.vector_store %arg9[%c0_75, %c0_76, %c0_77], %279 {strides = array<i32>} : memref<1x8x128xf32, #tpu.memory_space<vmem>>, vector<1x8x128xf32>,
      %cst_78 = arith.constant 0.000000e+00 : f32
      %281 = vector.broadcast %cst_78 : f32 to vector<1x8x128xf32>
      %c0_79 = arith.constant 0 : index
      %c0_80 = arith.constant 0 : index
      %c0_81 = arith.constant 0 : index
      %282 = vector.load %arg10[%c0_79, %c0_80, %c0_81] : memref<1x8x128xf32, #tpu.memory_space<vmem>>, vector<1x8x128xf32>
      tpu.vector_store %arg10[%c0_79, %c0_80, %c0_81], %281 {strides = array<i32>} : memref<1x8x128xf32, #tpu.memory_space<vmem>>, vector<1x8x128xf32>,
    } else {
    }
    %c0 = arith.constant 0 : index
    %c0_1 = arith.constant 0 : index
    %3 = vector.load %arg1[%c0, %c0_1] : memref<64x1xi32, #tpu.memory_space<vmem>>, vector<64x1xi32>
    %4 = tpu.iota {dimensions = array<i32: 1>} : vector<64x40xi32>
    %5 = vector.broadcast %3 : vector<64x1xi32> to vector<64x40xi32>
    %6 = arith.cmpi eq, %5, %4 : vector<64x40xi32>
    %7 = arith.extui %6 : vector<64x40xi1> to vector<64x40xi32>
    %8 = arith.sitofp %7 : vector<64x40xi32> to vector<64x40xf32>
    %9 = arith.truncf %8 : vector<64x40xf32> to vector<64x40xbf16>
    %c0_2 = arith.constant 0 : index
    %c0_3 = arith.constant 0 : index
    %10 = vector.load %arg2[%c0_2, %c0_3] : memref<40x512xbf16, #tpu.memory_space<vmem>>, vector<40x512xbf16>
    %cst = arith.constant dense<0.000000e+00> : vector<64x512xf32>
    %11 = tpu.matmul %9, %10, %cst {dimension_numbers = #tpu.dot_dimension_numbers<[1], [0], [0], [1], [0, 0, 1, 1], [], []>} : vector<64x40xbf16>, vector<40x512xbf16>, vector<64x512xf32> -> vector<64x512xf32>
    %c0_4 = arith.constant 0 : index
    %c0_5 = arith.constant 0 : index
    %12 = vector.load %arg4[%c0_4, %c0_5] : memref<1x512xf32, #tpu.memory_space<vmem>>, vector<1x512xf32>
    %13 = vector.broadcast %12 : vector<1x512xf32> to vector<64x512xf32>
    %14 = arith.addf %11, %13 : vector<64x512xf32>
    %15 = vector.shape_cast %14 : vector<64x512xf32> to vector<8x8x512xf32>
    %c0_6 = arith.constant 0 : index
    %c0_7 = arith.constant 0 : index
    %c0_8 = arith.constant 0 : index
    %16 = vector.load %arg8[%c0_6, %c0_7, %c0_8] : memref<8x8x512xf32, #tpu.memory_space<vmem>>, vector<8x8x512xf32>
    tpu.vector_store %arg8[%c0_6, %c0_7, %c0_8], %15 {strides = array<i32>} : memref<8x8x512xf32, #tpu.memory_space<vmem>>, vector<8x8x512xf32>,
    %c0_9 = arith.constant 0 : index
    %c0_10 = arith.constant 0 : index
    %17 = vector.load %arg3[%c0_9, %c0_10] : memref<128x512xbf16, #tpu.memory_space<vmem>>, vector<128x512xbf16>
    %c0_11 = arith.constant 0 : index
    %c0_12 = arith.constant 0 : index
    %c0_13 = arith.constant 0 : index
    %18 = vector.load %arg9[%c0_11, %c0_12, %c0_13] : memref<1x8x128xf32, #tpu.memory_space<vmem>>, vector<1x8x128xf32>
    %19 = vector.shape_cast %18 : vector<1x8x128xf32> to vector<8x128xf32>
    %c0_14 = arith.constant 0 : index
    %c0_15 = arith.constant 0 : index
    %c0_16 = arith.constant 0 : index
    %20 = vector.load %arg10[%c0_14, %c0_15, %c0_16] : memref<1x8x128xf32, #tpu.memory_space<vmem>>, vector<1x8x128xf32>
    %21 = vector.shape_cast %20 : vector<1x8x128xf32> to vector<8x128xf32>
    %c0_i32_17 = arith.constant 0 : i32
    %22 = arith.index_cast %c0_i32_17 : i32 to index
    %c0_18 = arith.constant 0 : index
    %c0_19 = arith.constant 0 : index
    %23 = vector.load %arg8[%22, %c0_18, %c0_19] : memref<8x8x512xf32, #tpu.memory_space<vmem>>, vector<1x8x512xf32>
    %24 = vector.shape_cast %23 : vector<1x8x512xf32> to vector<8x512xf32>
    %25 = arith.truncf %19 : vector<8x128xf32> to vector<8x128xbf16>
    %cst_20 = arith.constant dense<0.000000e+00> : vector<8x512xf32>
    %26 = tpu.matmul %25, %17, %cst_20 {dimension_numbers = #tpu.dot_dimension_numbers<[1], [0], [0], [1], [0, 0, 1, 1], [], []>} : vector<8x128xbf16>, vector<128x512xbf16>, vector<8x512xf32> -> vector<8x512xf32>
    %27 = arith.addf %24, %26 : vector<8x512xf32>
    %28 = vector.extract_strided_slice %27 {offsets = [0, 0], sizes = [8, 128], strides = [1, 1]} : vector<8x512xf32> to vector<8x128xf32>
    %29 = arith.negf %28 : vector<8x128xf32>
    %30 = math.exp %29 : vector<8x128xf32>
    %cst_21 = arith.constant 1.000000e+00 : f32
    %31 = vector.broadcast %cst_21 : f32 to vector<8x128xf32>
    %32 = arith.addf %31, %30 : vector<8x128xf32>
    %33 = arith.divf %31, %32 : vector<8x128xf32>
    %34 = vector.extract_strided_slice %27 {offsets = [0, 128], sizes = [8, 128], strides = [1, 1]} : vector<8x512xf32> to vector<8x128xf32>
    %35 = arith.negf %34 : vector<8x128xf32>
    %36 = math.exp %35 : vector<8x128xf32>
    %cst_22 = arith.constant 1.000000e+00 : f32
    %37 = vector.broadcast %cst_22 : f32 to vector<8x128xf32>
    %38 = arith.addf %37, %36 : vector<8x128xf32>
    %39 = arith.divf %37, %38 : vector<8x128xf32>
    %40 = vector.extract_strided_slice %27 {offsets = [0, 256], sizes = [8, 128], strides = [1, 1]} : vector<8x512xf32> to vector<8x128xf32>
    %41 = math.tanh %40 : vector<8x128xf32>
    %42 = vector.extract_strided_slice %27 {offsets = [0, 384], sizes = [8, 128], strides = [1, 1]} : vector<8x512xf32> to vector<8x128xf32>
    %43 = arith.negf %42 : vector<8x128xf32>
    %44 = math.exp %43 : vector<8x128xf32>
    %cst_23 = arith.constant 1.000000e+00 : f32
    %45 = vector.broadcast %cst_23 : f32 to vector<8x128xf32>
    %46 = arith.addf %45, %44 : vector<8x128xf32>
    %47 = arith.divf %45, %46 : vector<8x128xf32>
    %48 = arith.mulf %39, %21 : vector<8x128xf32>
    %49 = arith.mulf %33, %41 : vector<8x128xf32>
    %50 = arith.addf %48, %49 : vector<8x128xf32>
    %51 = math.tanh %50 : vector<8x128xf32>
    %52 = arith.mulf %47, %51 : vector<8x128xf32>
    %c1_i32 = arith.constant 1 : i32
    %53 = arith.index_cast %c1_i32 : i32 to index
    %c0_24 = arith.constant 0 : index
    %c0_25 = arith.constant 0 : index
    %54 = vector.load %arg8[%53, %c0_24, %c0_25] : memref<8x8x512xf32, #tpu.memory_space<vmem>>, vector<1x8x512xf32>
    %55 = vector.shape_cast %54 : vector<1x8x512xf32> to vector<8x512xf32>
    %56 = arith.truncf %52 : vector<8x128xf32> to vector<8x128xbf16>
    %cst_26 = arith.constant dense<0.000000e+00> : vector<8x512xf32>
    %57 = tpu.matmul %56, %17, %cst_26 {dimension_numbers = #tpu.dot_dimension_numbers<[1], [0], [0], [1], [0, 0, 1, 1], [], []>} : vector<8x128xbf16>, vector<128x512xbf16>, vector<8x512xf32> -> vector<8x512xf32>
    %58 = arith.addf %55, %57 : vector<8x512xf32>
    %59 = vector.extract_strided_slice %58 {offsets = [0, 0], sizes = [8, 128], strides = [1, 1]} : vector<8x512xf32> to vector<8x128xf32>
    %60 = arith.negf %59 : vector<8x128xf32>
    %61 = math.exp %60 : vector<8x128xf32>
    %cst_27 = arith.constant 1.000000e+00 : f32
    %62 = vector.broadcast %cst_27 : f32 to vector<8x128xf32>
    %63 = arith.addf %62, %61 : vector<8x128xf32>
    %64 = arith.divf %62, %63 : vector<8x128xf32>
    %65 = vector.extract_strided_slice %58 {offsets = [0, 128], sizes = [8, 128], strides = [1, 1]} : vector<8x512xf32> to vector<8x128xf32>
    %66 = arith.negf %65 : vector<8x128xf32>
    %67 = math.exp %66 : vector<8x128xf32>
    %cst_28 = arith.constant 1.000000e+00 : f32
    %68 = vector.broadcast %cst_28 : f32 to vector<8x128xf32>
    %69 = arith.addf %68, %67 : vector<8x128xf32>
    %70 = arith.divf %68, %69 : vector<8x128xf32>
    %71 = vector.extract_strided_slice %58 {offsets = [0, 256], sizes = [8, 128], strides = [1, 1]} : vector<8x512xf32> to vector<8x128xf32>
    %72 = math.tanh %71 : vector<8x128xf32>
    %73 = vector.extract_strided_slice %58 {offsets = [0, 384], sizes = [8, 128], strides = [1, 1]} : vector<8x512xf32> to vector<8x128xf32>
    %74 = arith.negf %73 : vector<8x128xf32>
    %75 = math.exp %74 : vector<8x128xf32>
    %cst_29 = arith.constant 1.000000e+00 : f32
    %76 = vector.broadcast %cst_29 : f32 to vector<8x128xf32>
    %77 = arith.addf %76, %75 : vector<8x128xf32>
    %78 = arith.divf %76, %77 : vector<8x128xf32>
    %79 = arith.mulf %70, %50 : vector<8x128xf32>
    %80 = arith.mulf %64, %72 : vector<8x128xf32>
    %81 = arith.addf %79, %80 : vector<8x128xf32>
    %82 = math.tanh %81 : vector<8x128xf32>
    %83 = arith.mulf %78, %82 : vector<8x128xf32>
    %c2_i32 = arith.constant 2 : i32
    %84 = arith.index_cast %c2_i32 : i32 to index
    %c0_30 = arith.constant 0 : index
    %c0_31 = arith.constant 0 : index
    %85 = vector.load %arg8[%84, %c0_30, %c0_31] : memref<8x8x512xf32, #tpu.memory_space<vmem>>, vector<1x8x512xf32>
    %86 = vector.shape_cast %85 : vector<1x8x512xf32> to vector<8x512xf32>
    %87 = arith.truncf %83 : vector<8x128xf32> to vector<8x128xbf16>
    %cst_32 = arith.constant dense<0.000000e+00> : vector<8x512xf32>
    %88 = tpu.matmul %87, %17, %cst_32 {dimension_numbers = #tpu.dot_dimension_numbers<[1], [0], [0], [1], [0, 0, 1, 1], [], []>} : vector<8x128xbf16>, vector<128x512xbf16>, vector<8x512xf32> -> vector<8x512xf32>
    %89 = arith.addf %86, %88 : vector<8x512xf32>
    %90 = vector.extract_strided_slice %89 {offsets = [0, 0], sizes = [8, 128], strides = [1, 1]} : vector<8x512xf32> to vector<8x128xf32>
    %91 = arith.negf %90 : vector<8x128xf32>
    %92 = math.exp %91 : vector<8x128xf32>
    %cst_33 = arith.constant 1.000000e+00 : f32
    %93 = vector.broadcast %cst_33 : f32 to vector<8x128xf32>
    %94 = arith.addf %93, %92 : vector<8x128xf32>
    %95 = arith.divf %93, %94 : vector<8x128xf32>
    %96 = vector.extract_strided_slice %89 {offsets = [0, 128], sizes = [8, 128], strides = [1, 1]} : vector<8x512xf32> to vector<8x128xf32>
    %97 = arith.negf %96 : vector<8x128xf32>
    %98 = math.exp %97 : vector<8x128xf32>
    %cst_34 = arith.constant 1.000000e+00 : f32
    %99 = vector.broadcast %cst_34 : f32 to vector<8x128xf32>
    %100 = arith.addf %99, %98 : vector<8x128xf32>
    %101 = arith.divf %99, %100 : vector<8x128xf32>
    %102 = vector.extract_strided_slice %89 {offsets = [0, 256], sizes = [8, 128], strides = [1, 1]} : vector<8x512xf32> to vector<8x128xf32>
    %103 = math.tanh %102 : vector<8x128xf32>
    %104 = vector.extract_strided_slice %89 {offsets = [0, 384], sizes = [8, 128], strides = [1, 1]} : vector<8x512xf32> to vector<8x128xf32>
    %105 = arith.negf %104 : vector<8x128xf32>
    %106 = math.exp %105 : vector<8x128xf32>
    %cst_35 = arith.constant 1.000000e+00 : f32
    %107 = vector.broadcast %cst_35 : f32 to vector<8x128xf32>
    %108 = arith.addf %107, %106 : vector<8x128xf32>
    %109 = arith.divf %107, %108 : vector<8x128xf32>
    %110 = arith.mulf %101, %81 : vector<8x128xf32>
    %111 = arith.mulf %95, %103 : vector<8x128xf32>
    %112 = arith.addf %110, %111 : vector<8x128xf32>
    %113 = math.tanh %112 : vector<8x128xf32>
    %114 = arith.mulf %109, %113 : vector<8x128xf32>
    %c3_i32 = arith.constant 3 : i32
    %115 = arith.index_cast %c3_i32 : i32 to index
    %c0_36 = arith.constant 0 : index
    %c0_37 = arith.constant 0 : index
    %116 = vector.load %arg8[%115, %c0_36, %c0_37] : memref<8x8x512xf32, #tpu.memory_space<vmem>>, vector<1x8x512xf32>
    %117 = vector.shape_cast %116 : vector<1x8x512xf32> to vector<8x512xf32>
    %118 = arith.truncf %114 : vector<8x128xf32> to vector<8x128xbf16>
    %cst_38 = arith.constant dense<0.000000e+00> : vector<8x512xf32>
    %119 = tpu.matmul %118, %17, %cst_38 {dimension_numbers = #tpu.dot_dimension_numbers<[1], [0], [0], [1], [0, 0, 1, 1], [], []>} : vector<8x128xbf16>, vector<128x512xbf16>, vector<8x512xf32> -> vector<8x512xf32>
    %120 = arith.addf %117, %119 : vector<8x512xf32>
    %121 = vector.extract_strided_slice %120 {offsets = [0, 0], sizes = [8, 128], strides = [1, 1]} : vector<8x512xf32> to vector<8x128xf32>
    %122 = arith.negf %121 : vector<8x128xf32>
    %123 = math.exp %122 : vector<8x128xf32>
    %cst_39 = arith.constant 1.000000e+00 : f32
    %124 = vector.broadcast %cst_39 : f32 to vector<8x128xf32>
    %125 = arith.addf %124, %123 : vector<8x128xf32>
    %126 = arith.divf %124, %125 : vector<8x128xf32>
    %127 = vector.extract_strided_slice %120 {offsets = [0, 128], sizes = [8, 128], strides = [1, 1]} : vector<8x512xf32> to vector<8x128xf32>
    %128 = arith.negf %127 : vector<8x128xf32>
    %129 = math.exp %128 : vector<8x128xf32>
    %cst_40 = arith.constant 1.000000e+00 : f32
    %130 = vector.broadcast %cst_40 : f32 to vector<8x128xf32>
    %131 = arith.addf %130, %129 : vector<8x128xf32>
    %132 = arith.divf %130, %131 : vector<8x128xf32>
    %133 = vector.extract_strided_slice %120 {offsets = [0, 256], sizes = [8, 128], strides = [1, 1]} : vector<8x512xf32> to vector<8x128xf32>
    %134 = math.tanh %133 : vector<8x128xf32>
    %135 = vector.extract_strided_slice %120 {offsets = [0, 384], sizes = [8, 128], strides = [1, 1]} : vector<8x512xf32> to vector<8x128xf32>
    %136 = arith.negf %135 : vector<8x128xf32>
    %137 = math.exp %136 : vector<8x128xf32>
    %cst_41 = arith.constant 1.000000e+00 : f32
    %138 = vector.broadcast %cst_41 : f32 to vector<8x128xf32>
    %139 = arith.addf %138, %137 : vector<8x128xf32>
    %140 = arith.divf %138, %139 : vector<8x128xf32>
    %141 = arith.mulf %132, %112 : vector<8x128xf32>
    %142 = arith.mulf %126, %134 : vector<8x128xf32>
    %143 = arith.addf %141, %142 : vector<8x128xf32>
    %144 = math.tanh %143 : vector<8x128xf32>
    %145 = arith.mulf %140, %144 : vector<8x128xf32>
    %c4_i32 = arith.constant 4 : i32
    %146 = arith.index_cast %c4_i32 : i32 to index
    %c0_42 = arith.constant 0 : index
    %c0_43 = arith.constant 0 : index
    %147 = vector.load %arg8[%146, %c0_42, %c0_43] : memref<8x8x512xf32, #tpu.memory_space<vmem>>, vector<1x8x512xf32>
    %148 = vector.shape_cast %147 : vector<1x8x512xf32> to vector<8x512xf32>
    %149 = arith.truncf %145 : vector<8x128xf32> to vector<8x128xbf16>
    %cst_44 = arith.constant dense<0.000000e+00> : vector<8x512xf32>
    %150 = tpu.matmul %149, %17, %cst_44 {dimension_numbers = #tpu.dot_dimension_numbers<[1], [0], [0], [1], [0, 0, 1, 1], [], []>} : vector<8x128xbf16>, vector<128x512xbf16>, vector<8x512xf32> -> vector<8x512xf32>
    %151 = arith.addf %148, %150 : vector<8x512xf32>
    %152 = vector.extract_strided_slice %151 {offsets = [0, 0], sizes = [8, 128], strides = [1, 1]} : vector<8x512xf32> to vector<8x128xf32>
    %153 = arith.negf %152 : vector<8x128xf32>
    %154 = math.exp %153 : vector<8x128xf32>
    %cst_45 = arith.constant 1.000000e+00 : f32
    %155 = vector.broadcast %cst_45 : f32 to vector<8x128xf32>
    %156 = arith.addf %155, %154 : vector<8x128xf32>
    %157 = arith.divf %155, %156 : vector<8x128xf32>
    %158 = vector.extract_strided_slice %151 {offsets = [0, 128], sizes = [8, 128], strides = [1, 1]} : vector<8x512xf32> to vector<8x128xf32>
    %159 = arith.negf %158 : vector<8x128xf32>
    %160 = math.exp %159 : vector<8x128xf32>
    %cst_46 = arith.constant 1.000000e+00 : f32
    %161 = vector.broadcast %cst_46 : f32 to vector<8x128xf32>
    %162 = arith.addf %161, %160 : vector<8x128xf32>
    %163 = arith.divf %161, %162 : vector<8x128xf32>
    %164 = vector.extract_strided_slice %151 {offsets = [0, 256], sizes = [8, 128], strides = [1, 1]} : vector<8x512xf32> to vector<8x128xf32>
    %165 = math.tanh %164 : vector<8x128xf32>
    %166 = vector.extract_strided_slice %151 {offsets = [0, 384], sizes = [8, 128], strides = [1, 1]} : vector<8x512xf32> to vector<8x128xf32>
    %167 = arith.negf %166 : vector<8x128xf32>
    %168 = math.exp %167 : vector<8x128xf32>
    %cst_47 = arith.constant 1.000000e+00 : f32
    %169 = vector.broadcast %cst_47 : f32 to vector<8x128xf32>
    %170 = arith.addf %169, %168 : vector<8x128xf32>
    %171 = arith.divf %169, %170 : vector<8x128xf32>
    %172 = arith.mulf %163, %143 : vector<8x128xf32>
    %173 = arith.mulf %157, %165 : vector<8x128xf32>
    %174 = arith.addf %172, %173 : vector<8x128xf32>
    %175 = math.tanh %174 : vector<8x128xf32>
    %176 = arith.mulf %171, %175 : vector<8x128xf32>
    %c5_i32 = arith.constant 5 : i32
    %177 = arith.index_cast %c5_i32 : i32 to index
    %c0_48 = arith.constant 0 : index
    %c0_49 = arith.constant 0 : index
    %178 = vector.load %arg8[%177, %c0_48, %c0_49] : memref<8x8x512xf32, #tpu.memory_space<vmem>>, vector<1x8x512xf32>
    %179 = vector.shape_cast %178 : vector<1x8x512xf32> to vector<8x512xf32>
    %180 = arith.truncf %176 : vector<8x128xf32> to vector<8x128xbf16>
    %cst_50 = arith.constant dense<0.000000e+00> : vector<8x512xf32>
    %181 = tpu.matmul %180, %17, %cst_50 {dimension_numbers = #tpu.dot_dimension_numbers<[1], [0], [0], [1], [0, 0, 1, 1], [], []>} : vector<8x128xbf16>, vector<128x512xbf16>, vector<8x512xf32> -> vector<8x512xf32>
    %182 = arith.addf %179, %181 : vector<8x512xf32>
    %183 = vector.extract_strided_slice %182 {offsets = [0, 0], sizes = [8, 128], strides = [1, 1]} : vector<8x512xf32> to vector<8x128xf32>
    %184 = arith.negf %183 : vector<8x128xf32>
    %185 = math.exp %184 : vector<8x128xf32>
    %cst_51 = arith.constant 1.000000e+00 : f32
    %186 = vector.broadcast %cst_51 : f32 to vector<8x128xf32>
    %187 = arith.addf %186, %185 : vector<8x128xf32>
    %188 = arith.divf %186, %187 : vector<8x128xf32>
    %189 = vector.extract_strided_slice %182 {offsets = [0, 128], sizes = [8, 128], strides = [1, 1]} : vector<8x512xf32> to vector<8x128xf32>
    %190 = arith.negf %189 : vector<8x128xf32>
    %191 = math.exp %190 : vector<8x128xf32>
    %cst_52 = arith.constant 1.000000e+00 : f32
    %192 = vector.broadcast %cst_52 : f32 to vector<8x128xf32>
    %193 = arith.addf %192, %191 : vector<8x128xf32>
    %194 = arith.divf %192, %193 : vector<8x128xf32>
    %195 = vector.extract_strided_slice %182 {offsets = [0, 256], sizes = [8, 128], strides = [1, 1]} : vector<8x512xf32> to vector<8x128xf32>
    %196 = math.tanh %195 : vector<8x128xf32>
    %197 = vector.extract_strided_slice %182 {offsets = [0, 384], sizes = [8, 128], strides = [1, 1]} : vector<8x512xf32> to vector<8x128xf32>
    %198 = arith.negf %197 : vector<8x128xf32>
    %199 = math.exp %198 : vector<8x128xf32>
    %cst_53 = arith.constant 1.000000e+00 : f32
    %200 = vector.broadcast %cst_53 : f32 to vector<8x128xf32>
    %201 = arith.addf %200, %199 : vector<8x128xf32>
    %202 = arith.divf %200, %201 : vector<8x128xf32>
    %203 = arith.mulf %194, %174 : vector<8x128xf32>
    %204 = arith.mulf %188, %196 : vector<8x128xf32>
    %205 = arith.addf %203, %204 : vector<8x128xf32>
    %206 = math.tanh %205 : vector<8x128xf32>
    %207 = arith.mulf %202, %206 : vector<8x128xf32>
    %c6_i32 = arith.constant 6 : i32
    %208 = arith.index_cast %c6_i32 : i32 to index
    %c0_54 = arith.constant 0 : index
    %c0_55 = arith.constant 0 : index
    %209 = vector.load %arg8[%208, %c0_54, %c0_55] : memref<8x8x512xf32, #tpu.memory_space<vmem>>, vector<1x8x512xf32>
    %210 = vector.shape_cast %209 : vector<1x8x512xf32> to vector<8x512xf32>
    %211 = arith.truncf %207 : vector<8x128xf32> to vector<8x128xbf16>
    %cst_56 = arith.constant dense<0.000000e+00> : vector<8x512xf32>
    %212 = tpu.matmul %211, %17, %cst_56 {dimension_numbers = #tpu.dot_dimension_numbers<[1], [0], [0], [1], [0, 0, 1, 1], [], []>} : vector<8x128xbf16>, vector<128x512xbf16>, vector<8x512xf32> -> vector<8x512xf32>
    %213 = arith.addf %210, %212 : vector<8x512xf32>
    %214 = vector.extract_strided_slice %213 {offsets = [0, 0], sizes = [8, 128], strides = [1, 1]} : vector<8x512xf32> to vector<8x128xf32>
    %215 = arith.negf %214 : vector<8x128xf32>
    %216 = math.exp %215 : vector<8x128xf32>
    %cst_57 = arith.constant 1.000000e+00 : f32
    %217 = vector.broadcast %cst_57 : f32 to vector<8x128xf32>
    %218 = arith.addf %217, %216 : vector<8x128xf32>
    %219 = arith.divf %217, %218 : vector<8x128xf32>
    %220 = vector.extract_strided_slice %213 {offsets = [0, 128], sizes = [8, 128], strides = [1, 1]} : vector<8x512xf32> to vector<8x128xf32>
    %221 = arith.negf %220 : vector<8x128xf32>
    %222 = math.exp %221 : vector<8x128xf32>
    %cst_58 = arith.constant 1.000000e+00 : f32
    %223 = vector.broadcast %cst_58 : f32 to vector<8x128xf32>
    %224 = arith.addf %223, %222 : vector<8x128xf32>
    %225 = arith.divf %223, %224 : vector<8x128xf32>
    %226 = vector.extract_strided_slice %213 {offsets = [0, 256], sizes = [8, 128], strides = [1, 1]} : vector<8x512xf32> to vector<8x128xf32>
    %227 = math.tanh %226 : vector<8x128xf32>
    %228 = vector.extract_strided_slice %213 {offsets = [0, 384], sizes = [8, 128], strides = [1, 1]} : vector<8x512xf32> to vector<8x128xf32>
    %229 = arith.negf %228 : vector<8x128xf32>
    %230 = math.exp %229 : vector<8x128xf32>
    %cst_59 = arith.constant 1.000000e+00 : f32
    %231 = vector.broadcast %cst_59 : f32 to vector<8x128xf32>
    %232 = arith.addf %231, %230 : vector<8x128xf32>
    %233 = arith.divf %231, %232 : vector<8x128xf32>
    %234 = arith.mulf %225, %205 : vector<8x128xf32>
    %235 = arith.mulf %219, %227 : vector<8x128xf32>
    %236 = arith.addf %234, %235 : vector<8x128xf32>
    %237 = math.tanh %236 : vector<8x128xf32>
    %238 = arith.mulf %233, %237 : vector<8x128xf32>
    %c7_i32 = arith.constant 7 : i32
    %239 = arith.index_cast %c7_i32 : i32 to index
    %c0_60 = arith.constant 0 : index
    %c0_61 = arith.constant 0 : index
    %240 = vector.load %arg8[%239, %c0_60, %c0_61] : memref<8x8x512xf32, #tpu.memory_space<vmem>>, vector<1x8x512xf32>
    %241 = vector.shape_cast %240 : vector<1x8x512xf32> to vector<8x512xf32>
    %242 = arith.truncf %238 : vector<8x128xf32> to vector<8x128xbf16>
    %cst_62 = arith.constant dense<0.000000e+00> : vector<8x512xf32>
    %243 = tpu.matmul %242, %17, %cst_62 {dimension_numbers = #tpu.dot_dimension_numbers<[1], [0], [0], [1], [0, 0, 1, 1], [], []>} : vector<8x128xbf16>, vector<128x512xbf16>, vector<8x512xf32> -> vector<8x512xf32>
    %244 = arith.addf %241, %243 : vector<8x512xf32>
    %245 = vector.extract_strided_slice %244 {offsets = [0, 0], sizes = [8, 128], strides = [1, 1]} : vector<8x512xf32> to vector<8x128xf32>
    %246 = arith.negf %245 : vector<8x128xf32>
    %247 = math.exp %246 : vector<8x128xf32>
    %cst_63 = arith.constant 1.000000e+00 : f32
    %248 = vector.broadcast %cst_63 : f32 to vector<8x128xf32>
    %249 = arith.addf %248, %247 : vector<8x128xf32>
    %250 = arith.divf %248, %249 : vector<8x128xf32>
    %251 = vector.extract_strided_slice %244 {offsets = [0, 128], sizes = [8, 128], strides = [1, 1]} : vector<8x512xf32> to vector<8x128xf32>
    %252 = arith.negf %251 : vector<8x128xf32>
    %253 = math.exp %252 : vector<8x128xf32>
    %cst_64 = arith.constant 1.000000e+00 : f32
    %254 = vector.broadcast %cst_64 : f32 to vector<8x128xf32>
    %255 = arith.addf %254, %253 : vector<8x128xf32>
    %256 = arith.divf %254, %255 : vector<8x128xf32>
    %257 = vector.extract_strided_slice %244 {offsets = [0, 256], sizes = [8, 128], strides = [1, 1]} : vector<8x512xf32> to vector<8x128xf32>
    %258 = math.tanh %257 : vector<8x128xf32>
    %259 = vector.extract_strided_slice %244 {offsets = [0, 384], sizes = [8, 128], strides = [1, 1]} : vector<8x512xf32> to vector<8x128xf32>
    %260 = arith.negf %259 : vector<8x128xf32>
    %261 = math.exp %260 : vector<8x128xf32>
    %cst_65 = arith.constant 1.000000e+00 : f32
    %262 = vector.broadcast %cst_65 : f32 to vector<8x128xf32>
    %263 = arith.addf %262, %261 : vector<8x128xf32>
    %264 = arith.divf %262, %263 : vector<8x128xf32>
    %265 = arith.mulf %256, %236 : vector<8x128xf32>
    %266 = arith.mulf %250, %258 : vector<8x128xf32>
    %267 = arith.addf %265, %266 : vector<8x128xf32>
    %268 = math.tanh %267 : vector<8x128xf32>
    %269 = arith.mulf %264, %268 : vector<8x128xf32>
    %c8_i32 = arith.constant 8 : i32
    %c0_66 = arith.constant 0 : index
    %c0_67 = arith.constant 0 : index
    %c0_68 = arith.constant 0 : index
    %270 = vector.load %arg9[%c0_66, %c0_67, %c0_68] : memref<1x8x128xf32, #tpu.memory_space<vmem>>, vector<1x8x128xf32>
    %271 = vector.shape_cast %270 : vector<1x8x128xf32> to vector<8x128xf32>
    %272 = vector.shape_cast %269 : vector<8x128xf32> to vector<1x8x128xf32>
    tpu.vector_store %arg9[%c0_66, %c0_67, %c0_68], %272 {strides = array<i32>} : memref<1x8x128xf32, #tpu.memory_space<vmem>>, vector<1x8x128xf32>,
    %c0_69 = arith.constant 0 : index
    %c0_70 = arith.constant 0 : index
    %c0_71 = arith.constant 0 : index
    %273 = vector.load %arg10[%c0_69, %c0_70, %c0_71] : memref<1x8x128xf32, #tpu.memory_space<vmem>>, vector<1x8x128xf32>
    %274 = vector.shape_cast %273 : vector<1x8x128xf32> to vector<8x128xf32>
    %275 = vector.shape_cast %267 : vector<8x128xf32> to vector<1x8x128xf32>
    tpu.vector_store %arg10[%c0_69, %c0_70, %c0_71], %275 {strides = array<i32>} : memref<1x8x128xf32, #tpu.memory_space<vmem>>, vector<1x8x128xf32>,
    %c2_i32_72 = arith.constant 2 : i32
    %276 = arith.cmpi eq, %arg0, %c2_i32_72 : i32
    %277 = arith.extui %276 : i1 to i32
    %c0_i32_73 = arith.constant 0 : i32
    %278 = arith.cmpi ne, %277, %c0_i32_73 : i32
    scf.if %278 {
      %279 = arith.truncf %269 : vector<8x128xf32> to vector<8x128xbf16>
      %c0_74 = arith.constant 0 : index
      %c0_75 = arith.constant 0 : index
      %280 = vector.load %arg5[%c0_74, %c0_75] : memref<128x128xbf16, #tpu.memory_space<vmem>>, vector<128x128xbf16>
      %cst_76 = arith.constant dense<0.000000e+00> : vector<8x128xf32>
      %281 = tpu.matmul %279, %280, %cst_76 {dimension_numbers = #tpu.dot_dimension_numbers<[1], [0], [0], [1], [0, 0, 1, 1], [], []>} : vector<8x128xbf16>, vector<128x128xbf16>, vector<8x128xf32> -> vector<8x128xf32>
      %c0_77 = arith.constant 0 : index
      %c0_78 = arith.constant 0 : index
      %282 = vector.load %arg6[%c0_77, %c0_78] : memref<1x128xf32, #tpu.memory_space<vmem>>, vector<1x128xf32>
      %283 = vector.broadcast %282 : vector<1x128xf32> to vector<8x128xf32>
      %284 = arith.addf %281, %283 : vector<8x128xf32>
      %cst_79 = arith.constant dense<0xFF800000> : vector<8xf32>
      %285 = vector.multi_reduction <maximumf>, %284, %cst_79 [1] : vector<8x128xf32> to vector<8xf32>
      %286 = vector.shape_cast %285 : vector<8xf32> to vector<8x1xf32>
      %287 = vector.broadcast %286 : vector<8x1xf32> to vector<8x128xf32>
      %288 = arith.subf %284, %287 : vector<8x128xf32>
      %289 = math.exp %288 : vector<8x128xf32>
      %cst_80 = arith.constant dense<0.000000e+00> : vector<8xf32>
      %290 = vector.multi_reduction <add>, %289, %cst_80 [1] : vector<8x128xf32> to vector<8xf32>
      %291 = vector.shape_cast %290 : vector<8xf32> to vector<8x1xf32>
      %292 = math.log %291 : vector<8x1xf32>
      %293 = vector.broadcast %292 : vector<8x1xf32> to vector<8x128xf32>
      %294 = arith.subf %288, %293 : vector<8x128xf32>
      %c0_81 = arith.constant 0 : index
      %c0_82 = arith.constant 0 : index
      %295 = vector.load %arg7[%c0_81, %c0_82] : memref<8x128xf32, #tpu.memory_space<vmem>>, vector<8x128xf32>
      tpu.vector_store %arg7[%c0_81, %c0_82], %294 {strides = array<i32>} : memref<8x128xf32, #tpu.memory_space<vmem>>, vector<8x128xf32>,
    } else {
    }
    return
  }
  func.func @transform_0(%arg0: i32) -> (i32, i32) {
    %c0_i32 = arith.constant 0 : i32
    %c0_i32_0 = arith.constant 0 : i32
    return %arg0, %c0_i32 : i32, i32
  }
  func.func @transform_1(%arg0: i32) -> (i32, i32) {
    %c0_i32 = arith.constant 0 : i32
    %c0_i32_0 = arith.constant 0 : i32
    %c0_i32_1 = arith.constant 0 : i32
    return %c0_i32, %c0_i32_0 : i32, i32
  }
  func.func @transform_2(%arg0: i32) -> (i32, i32) {
    %c0_i32 = arith.constant 0 : i32
    %c0_i32_0 = arith.constant 0 : i32
    %c0_i32_1 = arith.constant 0 : i32
    return %c0_i32, %c0_i32_0 : i32, i32
  }
  func.func @transform_3(%arg0: i32) -> (i32, i32) {
    %c0_i32 = arith.constant 0 : i32
    %c0_i32_0 = arith.constant 0 : i32
    %c0_i32_1 = arith.constant 0 : i32
    return %c0_i32, %c0_i32_0 : i32, i32
  }
  func.func @transform_4(%arg0: i32) -> (i32, i32) {
    %c0_i32 = arith.constant 0 : i32
    %c0_i32_0 = arith.constant 0 : i32
    %c0_i32_1 = arith.constant 0 : i32
    return %c0_i32, %c0_i32_0 : i32, i32
  }
  func.func @transform_5(%arg0: i32) -> (i32, i32) {
    %c0_i32 = arith.constant 0 : i32
    %c0_i32_0 = arith.constant 0 : i32
    %c0_i32_1 = arith.constant 0 : i32
    return %c0_i32, %c0_i32_0 : i32, i32
  }
  func.func @transform_6(%arg0: i32) -> (i32, i32) {
    %c0_i32 = arith.constant 0 : i32
    %c0_i32_0 = arith.constant 0 : i32
    %c0_i32_1 = arith.constant 0 : i32
    return %c0_i32, %c0_i32_0 : i32, i32
  }
}

</mosaic_0001>

<llo_original>
// kernel: tpu_custom_call.1
$region0: #{tpu_custom_call.1}
  #allocation0 [shape = 'u32[]', space=smem, size = 0x4, offset = 0x4, fixed_abs, tag = 'smem constant byte address 0x4 - core index']
  #allocation1 [shape = 'u32[72,128]{1,0:T(1,128)}', space=vmem, size = 0x9000, scoped, tag = 'internal scratch']
  #allocation2 [shape = 'f32[8,8,512]{2,1,0:T(8,128)}', space=vmem, size = 0x20000, scoped, tag = 'scratch operand']
  #allocation3 [shape = 'f32[1,8,128]{2,1,0:T(8,128)}', space=vmem, size = 0x1000, scoped, tag = 'scratch operand']
  #allocation4 [shape = 'f32[1,8,128]{2,1,0:T(8,128)}', space=vmem, size = 0x1000, scoped, tag = 'scratch operand']
  %s0 = inlined_call_operand.vmem [shape: s32[192,1], index: 0, kind: input, shape index: {}]
  %s1 = inlined_call_operand.vmem [shape: bf16[40,512], index: 1, kind: input, shape index: {}]
  %s2 = inlined_call_operand.hbm [shape: bf16[128,512], index: 2, kind: input, shape index: {}]
  %s3 = inlined_call_operand.vmem [shape: f32[1,512], index: 3, kind: input, shape index: {}]
  %s4 = inlined_call_operand.vmem [shape: bf16[128,128], index: 4, kind: input, shape index: {}]
  %s5 = inlined_call_operand.vmem [shape: f32[1,128], index: 5, kind: input, shape index: {}]
  %s6 = inlined_call_operand.hbm [shape: f32[8,128], index: 6, kind: output, shape index: {}]
  %s7 = sld [smem:[#allocation0]]
  $region69: #{tpu_custom_call.1} parent=0
    _
  %s9 = ssub.s32 1, %s7
  %s10 = scalar_select 0, %s9, %s7
  $region1: #{tpu_custom_call.1} parent=0
    #allocation5 [shape = 'u8[131072]{0}', space=vmem, size = 0x20000, scoped, tag = 'input window, operand 2, single buffered']
    #allocation6 [shape = 's32[2]{0}', space=sflag, size = 0x8, scoped, tag = 'scoped memory for tpu_custom_call.1']
    #allocation7 [shape = 's32[2]{0}', space=sflag, size = 0x8, scoped, tag = 'scoped memory for tpu_custom_call.1']
    #allocation8 [shape = 'u8[4096]{0}', space=vmem, size = 0x1000, scoped, tag = 'output window, operand 0, single buffered']
    %11 = vsyncpa [#allocation6], 0
    %12 = vsyncpa [#allocation7], 0
    loop: start=0, step=1, limit=5
    $region2: #{tpu_custom_call.1} parent=1 // loop_pre_header
      _
    $region3: #{tpu_custom_call.1} parent=1 // loop_header
      %s14 = sphi 0, %s18
      %p15 = scmp.ge.s32.totalorder %s14, 5
      %s24 = sphi 0, %s26
      %s27 = sphi 0, %s24
      %s28 = sphi 0, %s27
      %s44 = sphi 0, %s28
      %s48 = sphi 0, %s48
      %s50 = sphi 0, %s48
      %s51 = sphi 0, %s50
      %s65 = sphi 0, %s51
      %s69 = sphi 0, %s69
      %s71 = sphi 0, %s69
      %s72 = sphi 0, %s71
      %s86 = sphi 0, %s72
      %s90 = sphi 0, %s90
      %s92 = sphi 0, %s90
      %s93 = sphi 0, %s92
      %s107 = sphi 0, %s93
      %s111 = sphi 0, %s111
      %s113 = sphi 0, %s111
      %s114 = sphi 0, %s113
      %s128 = sphi 0, %s114
      %s132 = sphi 0, %s132
      %s134 = sphi 0, %s132
      %s135 = sphi 0, %s134
      %s149 = sphi 0, %s135
      %s153 = sphi 0, %s153
      %s155 = sphi 0, %s153
      %s156 = sphi 0, %s155
      %s170 = sphi 0, %s156
    $region4: #{tpu_custom_call.1} parent=1 // loop_header_branch
      %17 = sbr.rel (%p15) target = $region8
    $region5: #{tpu_custom_call.1} parent=1 // loop_body
      %s19 = ssub.s32 %s14, 1
      %s20 = ssub.s32 %s14, 2
      %s21 = sadd.s32 %s14, 1
      %s22 = ssub.s32 %s14, %s21
      %p23 = scmp.eq.s32.totalorder %s22, 0
      %s25 = sadd.s32 %s24, 1
      %s26 = scalar_select %p23, %s24, %s25
      %p29 = pneg %p23
      %p30 = scmp.eq.s32.totalorder %s14, 2
      %p31 = por %p29, %p30
      %p32 = scmp.ne.s32.totalorder %s24, %s27
      %p33 = scmp.eq.s32.totalorder %s14, 0
      %p34 = por %p32, %p33
      %p35 = scmp.ne.s32.totalorder %s24, %s27
      %p36 = scmp.eq.s32.totalorder %s19, 2
      %p37 = por %p35, %p36
      %p38 = scmp.ne.s32.totalorder %s27, %s28
      %p39 = scmp.eq.s32.totalorder %s19, 0
      %p40 = por %p38, %p39
      %p41 = scmp.ne.s32.totalorder %s27, %s28
      %p42 = scmp.eq.s32.totalorder %s20, 2
      %p43 = por %p41, %p42
      %p45 = scmp.ne.s32.totalorder %s28, %s44
      %p46 = scmp.eq.s32.totalorder %s20, 0
      %p47 = por %p45, %p46
      %s49 = sadd.s32 %s48, 1
      %p52 = scmp.eq.s32.totalorder %s14, 2
      %p53 = scmp.ne.s32.totalorder %s48, %s50
      %p54 = scmp.eq.s32.totalorder %s14, 0
      %p55 = por %p53, %p54
      %p56 = scmp.ne.s32.totalorder %s48, %s50
      %p57 = scmp.eq.s32.totalorder %s19, 2
      %p58 = por %p56, %p57
      %p59 = scmp.ne.s32.totalorder %s50, %s51
      %p60 = scmp.eq.s32.totalorder %s19, 0
      %p61 = por %p59, %p60
      %p62 = scmp.ne.s32.totalorder %s50, %s51
      %p63 = scmp.eq.s32.totalorder %s20, 2
      %p64 = por %p62, %p63
      %p66 = scmp.ne.s32.totalorder %s51, %s65
      %p67 = scmp.eq.s32.totalorder %s20, 0
      %p68 = por %p66, %p67
      %s70 = sadd.s32 %s69, 1
      %p73 = scmp.eq.s32.totalorder %s14, 2
      %p74 = scmp.ne.s32.totalorder %s69, %s71
      %p75 = scmp.eq.s32.totalorder %s14, 0
      %p76 = por %p74, %p75
      %p77 = scmp.ne.s32.totalorder %s69, %s71
      %p78 = scmp.eq.s32.totalorder %s19, 2
      %p79 = por %p77, %p78
      %p80 = scmp.ne.s32.totalorder %s71, %s72
      %p81 = scmp.eq.s32.totalorder %s19, 0
      %p82 = por %p80, %p81
      %p83 = scmp.ne.s32.totalorder %s71, %s72
      %p84 = scmp.eq.s32.totalorder %s20, 2
      %p85 = por %p83, %p84
      %p87 = scmp.ne.s32.totalorder %s72, %s86
      %p88 = scmp.eq.s32.totalorder %s20, 0
      %p89 = por %p87, %p88
      %s91 = sadd.s32 %s90, 1
      %p94 = scmp.eq.s32.totalorder %s14, 2
      %p95 = scmp.ne.s32.totalorder %s90, %s92
      %p96 = scmp.eq.s32.totalorder %s14, 0
      %p97 = por %p95, %p96
      %p98 = scmp.ne.s32.totalorder %s90, %s92
      %p99 = scmp.eq.s32.totalorder %s19, 2
      %p100 = por %p98, %p99
      %p101 = scmp.ne.s32.totalorder %s92, %s93
      %p102 = scmp.eq.s32.totalorder %s19, 0
      %p103 = por %p101, %p102
      %p104 = scmp.ne.s32.totalorder %s92, %s93
      %p105 = scmp.eq.s32.totalorder %s20, 2
      %p106 = por %p104, %p105
      %p108 = scmp.ne.s32.totalorder %s93, %s107
      %p109 = scmp.eq.s32.totalorder %s20, 0
      %p110 = por %p108, %p109
      %s112 = sadd.s32 %s111, 1
      %p115 = scmp.eq.s32.totalorder %s14, 2
      %p116 = scmp.ne.s32.totalorder %s111, %s113
      %p117 = scmp.eq.s32.totalorder %s14, 0
      %p118 = por %p116, %p117
      %p119 = scmp.ne.s32.totalorder %s111, %s113
      %p120 = scmp.eq.s32.totalorder %s19, 2
      %p121 = por %p119, %p120
      %p122 = scmp.ne.s32.totalorder %s113, %s114
      %p123 = scmp.eq.s32.totalorder %s19, 0
      %p124 = por %p122, %p123
      %p125 = scmp.ne.s32.totalorder %s113, %s114
      %p126 = scmp.eq.s32.totalorder %s20, 2
      %p127 = por %p125, %p126
      %p129 = scmp.ne.s32.totalorder %s114, %s128
      %p130 = scmp.eq.s32.totalorder %s20, 0
      %p131 = por %p129, %p130
      %s133 = sadd.s32 %s132, 1
      %p136 = scmp.eq.s32.totalorder %s14, 2
      %p137 = scmp.ne.s32.totalorder %s132, %s134
      %p138 = scmp.eq.s32.totalorder %s14, 0
      %p139 = por %p137, %p138
      %p140 = scmp.ne.s32.totalorder %s132, %s134
      %p141 = scmp.eq.s32.totalorder %s19, 2
      %p142 = por %p140, %p141
      %p143 = scmp.ne.s32.totalorder %s134, %s135
      %p144 = scmp.eq.s32.totalorder %s19, 0
      %p145 = por %p143, %p144
      %p146 = scmp.ne.s32.totalorder %s134, %s135
      %p147 = scmp.eq.s32.totalorder %s20, 2
      %p148 = por %p146, %p147
      %p150 = scmp.ne.s32.totalorder %s135, %s149
      %p151 = scmp.eq.s32.totalorder %s20, 0
      %p152 = por %p150, %p151
      %s154 = sadd.s32 %s153, 1
      %p157 = scmp.eq.s32.totalorder %s14, 2
      %p158 = scmp.ne.s32.totalorder %s153, %s155
      %p159 = scmp.eq.s32.totalorder %s14, 0
      %p160 = por %p158, %p159
      %p161 = scmp.ne.s32.totalorder %s153, %s155
      %p162 = scmp.eq.s32.totalorder %s19, 2
      %p163 = por %p161, %p162
      %p164 = scmp.ne.s32.totalorder %s155, %s156
      %p165 = scmp.eq.s32.totalorder %s19, 0
      %p166 = por %p164, %p165
      %p167 = scmp.ne.s32.totalorder %s155, %s156
      %p168 = scmp.eq.s32.totalorder %s20, 2
      %p169 = por %p167, %p168
      %p171 = scmp.ne.s32.totalorder %s156, %s170
      %p172 = scmp.eq.s32.totalorder %s20, 0
      %p173 = por %p171, %p172
      %p174 = scmp.le.s32.totalorder 1, %s14
      %p175 = scmp.lt.s32.totalorder %s14, 4
      %p176 = pnand %p174, %p175
      %p177 = pneg %p176
      // Predicated region
      $region9: #{tpu_custom_call.1} parent=5 // pred_check
        _
      $region10: #{tpu_custom_call.1} parent=5 // pred_check_branch
        %179 = sbr.rel (%p176) target = $region12
      $region11: #{tpu_custom_call.1} parent=5 // pred_region
        %s180 = ssub.s32 %s14, 1
        // Predicated region
        $region13: #{tpu_custom_call.1} parent=11 // pred_check
          %p181 = pneg %p61
        $region14: #{tpu_custom_call.1} parent=11 // pred_check_branch
          %183 = sbr.rel (%p181) target = $region16
        $region15: #{tpu_custom_call.1} parent=11 // pred_region
          _
        $region16: #{tpu_custom_call.1} parent=11 // pred_fallthru
          _
        // Predicated region
        $region17: #{tpu_custom_call.1} parent=11 // pred_check
          %p184 = pneg %p82
        $region18: #{tpu_custom_call.1} parent=11 // pred_check_branch
          %186 = sbr.rel (%p184) target = $region20
        $region19: #{tpu_custom_call.1} parent=11 // pred_region
          %188 = vsyncadd [#allocation6], 0
          %s189 = sshll.u32 %s2, 4
          %s190 = int_to_ptr.hbm [resolvable:$true] %s189
          %s191 = sshll.u32 [#allocation5], 4
          %s192 = int_to_ptr.vmem [resolvable:$true] %s191
          %197 = dma.hbm_to_vmem [thread:$0]  %s190, 4096, %s192, [#allocation6], 256, 256, 16
        $region20: #{tpu_custom_call.1} parent=11 // pred_fallthru
          _
        // Predicated region
        $region21: #{tpu_custom_call.1} parent=11 // pred_check
          %p198 = pneg %p103
        $region22: #{tpu_custom_call.1} parent=11 // pred_check_branch
          %200 = sbr.rel (%p198) target = $region24
        $region23: #{tpu_custom_call.1} parent=11 // pred_region
          _
        $region24: #{tpu_custom_call.1} parent=11 // pred_fallthru
          _
        // Predicated region
        $region25: #{tpu_custom_call.1} parent=11 // pred_check
          %p201 = pneg %p124
        $region26: #{tpu_custom_call.1} parent=11 // pred_check_branch
          %203 = sbr.rel (%p201) target = $region28
        $region27: #{tpu_custom_call.1} parent=11 // pred_region
          _
        $region28: #{tpu_custom_call.1} parent=11 // pred_fallthru
          _
        // Predicated region
        $region29: #{tpu_custom_call.1} parent=11 // pred_check
          %p204 = pneg %p145
        $region30: #{tpu_custom_call.1} parent=11 // pred_check_branch
          %206 = sbr.rel (%p204) target = $region32
        $region31: #{tpu_custom_call.1} parent=11 // pred_region
          _
        $region32: #{tpu_custom_call.1} parent=11 // pred_fallthru
          _
      $region12: #{tpu_custom_call.1} parent=5 // pred_fallthru
        _
      %p207 = scmp.lt.s32.totalorder %s14, 3
      // Predicated region
      $region33: #{tpu_custom_call.1} parent=5 // pred_check
        %p208 = pneg %p207
      $region34: #{tpu_custom_call.1} parent=5 // pred_check_branch
        %210 = sbr.rel (%p208) target = $region36
      $region35: #{tpu_custom_call.1} parent=5 // pred_region
        // Predicated region
        $region37: #{tpu_custom_call.1} parent=35 // pred_check
          %p211 = pneg %p34
        $region38: #{tpu_custom_call.1} parent=35 // pred_check_branch
          %213 = sbr.rel (%p211) target = $region40
        $region39: #{tpu_custom_call.1} parent=35 // pred_region
          %s214 = smul.u32 8, %s14
          %p215 = scmp.lt.s32.totalorder %s214, 23
          %s216 = scalar_select %p215, %s214, 23
          %s217 = smul.addr %s216, 8
          %s218 = scalar_lea.vmem %s0, %s217
          %s219 = smul.u32 8, %s14
        $region40: #{tpu_custom_call.1} parent=35 // pred_fallthru
          _
      $region36: #{tpu_custom_call.1} parent=5 // pred_fallthru
        _
      %p220 = scmp.le.s32.totalorder 1, %s14
      %p221 = scmp.lt.s32.totalorder %s14, 4
      %p222 = pnand %p220, %p221
      %p223 = pneg %p222
      // Predicated region
      $region41: #{tpu_custom_call.1} parent=5 // pred_check
        _
      $region42: #{tpu_custom_call.1} parent=5 // pred_check_branch
        %225 = sbr.rel (%p222) target = $region44
      $region43: #{tpu_custom_call.1} parent=5 // pred_region
        %s226 = ssub.s32 %s14, 1
        // Predicated region
        $region45: #{tpu_custom_call.1} parent=43 // pred_check
          %p227 = pneg %p82
        $region46: #{tpu_custom_call.1} parent=43 // pred_check_branch
          %229 = sbr.rel (%p227) target = $region48
        $region47: #{tpu_custom_call.1} parent=43 // pred_region
          %231 = dma.done [#allocation6], 4096
        $region48: #{tpu_custom_call.1} parent=43 // pred_fallthru
          _
        %s232 = smul.u32 8, %s19
        %p233 = scmp.lt.s32.totalorder %s232, 23
        %s234 = scalar_select %p233, %s232, 23
        %s235 = smul.addr %s234, 8
        %s236 = scalar_lea.vmem %s0, %s235
        %p237 = pneg %p40
        %p238 = pneg %p37
        %p239 = pneg %p61
        %p240 = pneg %p58
        %p241 = pneg %p82
        %p242 = pneg %p79
        %p243 = pneg %p103
        %p244 = pneg %p100
        %p245 = pneg %p124
        %p246 = pneg %p121
        %p247 = pneg %p145
        %p248 = pneg %p142
        %p249 = pneg %p166
        %p250 = pneg %p163
        %s251 = smul.u32 8, %s19
        %p252 = scmp.lt.s32.totalorder %s251, 23
        %s253 = scalar_select %p252, %s251, 23
        %s254 = smul.addr %s253, 8
        %s255 = scalar_lea.vmem %s0, %s254
        %s256 = smul.u32 8, %s19
        %p258 = scmp.eq.s32.totalorder %s19, 0
        // Predicated region
        $region49: #{tpu_custom_call.1} parent=43 // pred_check
          %p259 = pneg %p258
        $region50: #{tpu_custom_call.1} parent=43 // pred_check_branch
          %261 = sbr.rel (%p259) target = $region52
        $region51: #{tpu_custom_call.1} parent=43 // pred_region
          %262 = vst [vmem:[#allocation3] sm:$0xff] 0.0
          %263 = vst [vmem:[#allocation4] sm:$0xff] 0.0
        $region52: #{tpu_custom_call.1} parent=43 // pred_fallthru
          _
        %v264 = vld [vmem:[%s255] sm:$0xff]
        %v265 = vld [vmem:[%s255 + $0x8] sm:$0xff]
        %v266 = vld [vmem:[%s255 + $0x10] sm:$0xff]
        %v267 = vld [vmem:[%s255 + $0x18] sm:$0xff]
        %v268 = vld [vmem:[%s255 + $0x20] sm:$0xff]
        %v269 = vld [vmem:[%s255 + $0x28] sm:$0xff]
        %v270 = vld [vmem:[%s255 + $0x30] sm:$0xff]
        %v271 = vld [vmem:[%s255 + $0x38] sm:$0xff]
        %v272 = vlaneseq
        %v273 = vand.u32 %v272, 127
        %274 = vset.pattern.permute.xlu0 0
        %275 = vperm.xlu0 %274, %v264
        %v276 = vpop.permute.xlu0 %275
        %277 = vset.pattern.permute.xlu0 0
        %278 = vperm.xlu0 %277, %v265
        %v279 = vpop.permute.xlu0 %278
        %280 = vset.pattern.permute.xlu0 0
        %281 = vperm.xlu0 %280, %v266
        %v282 = vpop.permute.xlu0 %281
        %283 = vset.pattern.permute.xlu0 0
        %284 = vperm.xlu0 %283, %v267
        %v285 = vpop.permute.xlu0 %284
        %286 = vset.pattern.permute.xlu0 0
        %287 = vperm.xlu0 %286, %v268
        %v288 = vpop.permute.xlu0 %287
        %289 = vset.pattern.permute.xlu0 0
        %290 = vperm.xlu0 %289, %v269
        %v291 = vpop.permute.xlu0 %290
        %292 = vset.pattern.permute.xlu0 0
        %293 = vperm.xlu0 %292, %v270
        %v294 = vpop.permute.xlu0 %293
        %295 = vset.pattern.permute.xlu0 0
        %296 = vperm.xlu0 %295, %v271
        %v297 = vpop.permute.xlu0 %296
        %vm298 = vcmp.eq.s32.totalorder %v276, %v273
        %vm299 = vcmp.eq.s32.totalorder %v279, %v273
        %vm300 = vcmp.eq.s32.totalorder %v282, %v273
        %vm301 = vcmp.eq.s32.totalorder %v285, %v273
        %vm302 = vcmp.eq.s32.totalorder %v288, %v273
        %vm303 = vcmp.eq.s32.totalorder %v291, %v273
        %vm304 = vcmp.eq.s32.totalorder %v294, %v273
        %vm305 = vcmp.eq.s32.totalorder %v297, %v273
        %v306 = vsel %vm298, 1, 0
        %v307 = vsel %vm299, 1, 0
        %v308 = vsel %vm300, 1, 0
        %v309 = vsel %vm301, 1, 0
        %v310 = vsel %vm302, 1, 0
        %v311 = vsel %vm303, 1, 0
        %v312 = vsel %vm304, 1, 0
        %v313 = vsel %vm305, 1, 0
        %v314 = vcvt.s32.f32 %v306
        %v315 = vcvt.s32.f32 %v307
        %v316 = vcvt.s32.f32 %v308
        %v317 = vcvt.s32.f32 %v309
        %v318 = vcvt.s32.f32 %v310
        %v319 = vcvt.s32.f32 %v311
        %v320 = vcvt.s32.f32 %v312
        %v321 = vcvt.s32.f32 %v313
        %v322 = vpack.c.bf16 %v315, %v314
        %v323 = vpack.c.bf16 %v317, %v316
        %v324 = vpack.c.bf16 %v319, %v318
        %v325 = vpack.c.bf16 %v321, %v320
        %v326 = vld [vmem:[%s1] sm:$0xff]
        %v327 = vld [vmem:[%s1 + $0x8] sm:$0xff]
        %v328 = vld [vmem:[%s1 + $0x10] sm:$0xff]
        %v329 = vld [vmem:[%s1 + $0x18] sm:$0xff]
        %v330 = vld [vmem:[%s1 + $0x20] sm:$0xff]
        %v331 = vld [vmem:[%s1 + $0x28] sm:$0xff]
        %v332 = vld [vmem:[%s1 + $0x30] sm:$0xff]
        %v333 = vld [vmem:[%s1 + $0x38] sm:$0xff]
        %v334 = vld [vmem:[%s1 + $0x40] sm:$0xff]
        %v335 = vld [vmem:[%s1 + $0x48] sm:$0xff]
        %v336 = vld [vmem:[%s3] sm:$0xf]
        %v338 = vperm.slane %v336, 0
        %v339 = vperm.slane %v336, 1
        %v340 = vperm.slane %v336, 2
        %v341 = vperm.slane %v336, 3
        %v356 = vunpack.c.l.b16 %v326
        %v357 = vunpack.c.h.b16 %v326
        %v358 = vunpack.c.l.b16 %v327
        %v359 = vunpack.c.h.b16 %v327
        %v360 = vunpack.c.l.b16 %v328
        %v361 = vunpack.c.h.b16 %v328
        %v362 = vunpack.c.l.b16 %v329
        %v363 = vunpack.c.h.b16 %v329
        %v364 = vunpack.c.l.b16 %v330
        %v365 = vunpack.c.h.b16 %v330
        %v366 = vunpack.c.l.b16 %v331
        %v367 = vunpack.c.h.b16 %v331
        %v368 = vunpack.c.l.b16 %v332
        %v369 = vunpack.c.h.b16 %v332
        %v370 = vunpack.c.l.b16 %v333
        %v371 = vunpack.c.h.b16 %v333
        %v372 = vunpack.c.l.b16 %v334
        %v373 = vunpack.c.h.b16 %v334
        %v374 = vunpack.c.l.b16 %v335
        %v375 = vunpack.c.h.b16 %v335
        %v376 = vpack.c.b16 %v360, %v356
        %v377 = vpack.c.b16 %v361, %v357
        %v378 = vpack.c.b16 %v362, %v358
        %v379 = vpack.c.b16 %v363, %v359
        %v380 = vpack.c.b16 %v368, %v364
        %v381 = vpack.c.b16 %v369, %v365
        %v382 = vpack.c.b16 %v370, %v366
        %v383 = vpack.c.b16 %v371, %v367
        %v384 = vpack.c.b16 %v372, %v372
        %v385 = vpack.c.b16 %v373, %v373
        %v386 = vpack.c.b16 %v374, %v374
        %v387 = vpack.c.b16 %v375, %v375
        %vm396 = vcmask 326656
        %v398 = vsel %vm396, %v322, 0
        %v401 = vsel %vm396, %v323, 0
        %v404 = vsel %vm396, %v324, 0
        %v407 = vsel %vm396, %v325, 0
        %vm409 = vcmask 1043456
        %v411 = vsel %vm409, %v384, 0
        %v414 = vsel %vm409, %v385, 0
        %v417 = vsel %vm409, %v386, 0
        %v420 = vsel %vm409, %v387, 0
        %422 = vmatpush.bf16.msra.mxu0 0
        %423 = vmatpush.bf16.msra.mxu0 0
        %424 = vmatpush.bf16.msra.mxu0 0
        %425 = vmatpush.bf16.msra.mxu0 0
        %426 = vmatpush.bf16.msra.mxu0 0
        %427 = vmatpush.bf16.msra.mxu0 %v411
        %428 = vmatpush.bf16.msra.mxu0 %v380
        %429 = vmatpush.bf16.msra.mxu0 %v376
        %430 = vmatmul.bf16.gmra.mxu0 %v398
        %v431 = vpop.f32.mrf.mxu0
        %v432 = vadd.f32 %v338, %v431
        %v433 = vpop.f32.mrf.mxu0
        %v434 = vadd.f32 %v338, %v433
        %435 = vmatmul.bf16.gmra.mxu0 %v401
        %v436 = vpop.f32.mrf.mxu0
        %v437 = vadd.f32 %v338, %v436
        %v438 = vpop.f32.mrf.mxu0
        %v439 = vadd.f32 %v338, %v438
        %440 = vmatmul.bf16.gmra.mxu0 %v404
        %v441 = vpop.f32.mrf.mxu0
        %v442 = vadd.f32 %v338, %v441
        %v443 = vpop.f32.mrf.mxu0
        %v444 = vadd.f32 %v338, %v443
        %445 = vmatmul.bf16.gmra.mxu0 %v407
        %v446 = vpop.f32.mrf.mxu0
        %v447 = vadd.f32 %v338, %v446
        %v448 = vpop.f32.mrf.mxu0
        %v449 = vadd.f32 %v338, %v448
        %450 = vdwg.mxu0
        %451 = vmatpush.bf16.msra.mxu0 0
        %452 = vmatpush.bf16.msra.mxu0 0
        %453 = vmatpush.bf16.msra.mxu0 0
        %454 = vmatpush.bf16.msra.mxu0 0
        %455 = vmatpush.bf16.msra.mxu0 0
        %456 = vmatpush.bf16.msra.mxu0 %v414
        %457 = vmatpush.bf16.msra.mxu0 %v381
        %458 = vmatpush.bf16.msra.mxu0 %v377
        %459 = vmatmul.bf16.gmra.mxu0 %v398
        %v460 = vpop.f32.mrf.mxu0
        %v461 = vadd.f32 %v339, %v460
        %v462 = vpop.f32.mrf.mxu0
        %v463 = vadd.f32 %v339, %v462
        %464 = vmatmul.bf16.gmra.mxu0 %v401
        %v465 = vpop.f32.mrf.mxu0
        %v466 = vadd.f32 %v339, %v465
        %v467 = vpop.f32.mrf.mxu0
        %v468 = vadd.f32 %v339, %v467
        %469 = vmatmul.bf16.gmra.mxu0 %v404
        %v470 = vpop.f32.mrf.mxu0
        %v471 = vadd.f32 %v339, %v470
        %v472 = vpop.f32.mrf.mxu0
        %v473 = vadd.f32 %v339, %v472
        %474 = vmatmul.bf16.gmra.mxu0 %v407
        %v475 = vpop.f32.mrf.mxu0
        %v476 = vadd.f32 %v339, %v475
        %v477 = vpop.f32.mrf.mxu0
        %v478 = vadd.f32 %v339, %v477
        %479 = vdwg.mxu0
        %480 = vmatpush.bf16.msra.mxu0 0
        %481 = vmatpush.bf16.msra.mxu0 0
        %482 = vmatpush.bf16.msra.mxu0 0
        %483 = vmatpush.bf16.msra.mxu0 0
        %484 = vmatpush.bf16.msra.mxu0 0
        %485 = vmatpush.bf16.msra.mxu0 %v417
        %486 = vmatpush.bf16.msra.mxu0 %v382
        %487 = vmatpush.bf16.msra.mxu0 %v378
        %488 = vmatmul.bf16.gmra.mxu0 %v398
        %v489 = vpop.f32.mrf.mxu0
        %v490 = vadd.f32 %v340, %v489
        %v491 = vpop.f32.mrf.mxu0
        %v492 = vadd.f32 %v340, %v491
        %493 = vmatmul.bf16.gmra.mxu0 %v401
        %v494 = vpop.f32.mrf.mxu0
        %v495 = vadd.f32 %v340, %v494
        %v496 = vpop.f32.mrf.mxu0
        %v497 = vadd.f32 %v340, %v496
        %498 = vmatmul.bf16.gmra.mxu0 %v404
        %v499 = vpop.f32.mrf.mxu0
        %v500 = vadd.f32 %v340, %v499
        %v501 = vpop.f32.mrf.mxu0
        %v502 = vadd.f32 %v340, %v501
        %503 = vmatmul.bf16.gmra.mxu0 %v407
        %v504 = vpop.f32.mrf.mxu0
        %v505 = vadd.f32 %v340, %v504
        %v506 = vpop.f32.mrf.mxu0
        %v507 = vadd.f32 %v340, %v506
        %508 = vdwg.mxu0
        %509 = vmatpush.bf16.msra.mxu0 0
        %510 = vmatpush.bf16.msra.mxu0 0
        %511 = vmatpush.bf16.msra.mxu0 0
        %512 = vmatpush.bf16.msra.mxu0 0
        %513 = vmatpush.bf16.msra.mxu0 0
        %514 = vmatpush.bf16.msra.mxu0 %v420
        %515 = vmatpush.bf16.msra.mxu0 %v383
        %516 = vmatpush.bf16.msra.mxu0 %v379
        %517 = vmatmul.bf16.gmra.mxu0 %v398
        %v518 = vpop.f32.mrf.mxu0
        %v519 = vadd.f32 %v341, %v518
        %v520 = vpop.f32.mrf.mxu0
        %v521 = vadd.f32 %v341, %v520
        %522 = vmatmul.bf16.gmra.mxu0 %v401
        %v523 = vpop.f32.mrf.mxu0
        %v524 = vadd.f32 %v341, %v523
        %v525 = vpop.f32.mrf.mxu0
        %v526 = vadd.f32 %v341, %v525
        %527 = vmatmul.bf16.gmra.mxu0 %v404
        %v528 = vpop.f32.mrf.mxu0
        %v529 = vadd.f32 %v341, %v528
        %v530 = vpop.f32.mrf.mxu0
        %v531 = vadd.f32 %v341, %v530
        %532 = vmatmul.bf16.gmra.mxu0 %v407
        %v533 = vpop.f32.mrf.mxu0
        %v534 = vadd.f32 %v341, %v533
        %v535 = vpop.f32.mrf.mxu0
        %v536 = vadd.f32 %v341, %v535
        %537 = vdwg.mxu0
        %538 = vst [vmem:[#allocation2] sm:$0xff] %v432
        %539 = vst [vmem:[#allocation2 + $0x8] sm:$0xff] %v461
        %540 = vst [vmem:[#allocation2 + $0x10] sm:$0xff] %v490
        %541 = vst [vmem:[#allocation2 + $0x18] sm:$0xff] %v519
        %542 = vst [vmem:[#allocation2 + $0x20] sm:$0xff] %v434
        %543 = vst [vmem:[#allocation2 + $0x28] sm:$0xff] %v463
        %544 = vst [vmem:[#allocation2 + $0x30] sm:$0xff] %v492
        %545 = vst [vmem:[#allocation2 + $0x38] sm:$0xff] %v521
        %546 = vst [vmem:[#allocation2 + $0x40] sm:$0xff] %v437
        %547 = vst [vmem:[#allocation2 + $0x48] sm:$0xff] %v466
        %548 = vst [vmem:[#allocation2 + $0x50] sm:$0xff] %v495
        %549 = vst [vmem:[#allocation2 + $0x58] sm:$0xff] %v524
        %550 = vst [vmem:[#allocation2 + $0x60] sm:$0xff] %v439
        %551 = vst [vmem:[#allocation2 + $0x68] sm:$0xff] %v468
        %552 = vst [vmem:[#allocation2 + $0x70] sm:$0xff] %v497
        %553 = vst [vmem:[#allocation2 + $0x78] sm:$0xff] %v526
        %554 = vst [vmem:[#allocation2 + $0x80] sm:$0xff] %v442
        %555 = vst [vmem:[#allocation2 + $0x88] sm:$0xff] %v471
        %556 = vst [vmem:[#allocation2 + $0x90] sm:$0xff] %v500
        %557 = vst [vmem:[#allocation2 + $0x98] sm:$0xff] %v529
        %558 = vst [vmem:[#allocation2 + $0xa0] sm:$0xff] %v444
        %559 = vst [vmem:[#allocation2 + $0xa8] sm:$0xff] %v473
        %560 = vst [vmem:[#allocation2 + $0xb0] sm:$0xff] %v502
        %561 = vst [vmem:[#allocation2 + $0xb8] sm:$0xff] %v531
        %562 = vst [vmem:[#allocation2 + $0xc0] sm:$0xff] %v447
        %563 = vst [vmem:[#allocation2 + $0xc8] sm:$0xff] %v476
        %564 = vst [vmem:[#allocation2 + $0xd0] sm:$0xff] %v505
        %565 = vst [vmem:[#allocation2 + $0xd8] sm:$0xff] %v534
        %566 = vst [vmem:[#allocation2 + $0xe0] sm:$0xff] %v449
        %567 = vst [vmem:[#allocation2 + $0xe8] sm:$0xff] %v478
        %568 = vst [vmem:[#allocation2 + $0xf0] sm:$0xff] %v507
        %569 = vst [vmem:[#allocation2 + $0xf8] sm:$0xff] %v536
        %v570 = vld [vmem:[#allocation5] sm:$0xff]
        %v571 = vld [vmem:[#allocation5 + $0x8] sm:$0xff]
        %v572 = vld [vmem:[#allocation5 + $0x10] sm:$0xff]
        %v573 = vld [vmem:[#allocation5 + $0x18] sm:$0xff]
        %v574 = vld [vmem:[#allocation5 + $0x20] sm:$0xff]
        %v575 = vld [vmem:[#allocation5 + $0x28] sm:$0xff]
        %v576 = vld [vmem:[#allocation5 + $0x30] sm:$0xff]
        %v577 = vld [vmem:[#allocation5 + $0x38] sm:$0xff]
        %v578 = vld [vmem:[#allocation5 + $0x40] sm:$0xff]
        %v579 = vld [vmem:[#allocation5 + $0x48] sm:$0xff]
        %v580 = vld [vmem:[#allocation5 + $0x50] sm:$0xff]
        %v581 = vld [vmem:[#allocation5 + $0x58] sm:$0xff]
        %v582 = vld [vmem:[#allocation5 + $0x60] sm:$0xff]
        %v583 = vld [vmem:[#allocation5 + $0x68] sm:$0xff]
        %v584 = vld [vmem:[#allocation5 + $0x70] sm:$0xff]
        %v585 = vld [vmem:[#allocation5 + $0x78] sm:$0xff]
        %v586 = vld [vmem:[#allocation5 + $0x80] sm:$0xff]
        %v587 = vld [vmem:[#allocation5 + $0x88] sm:$0xff]
        %v588 = vld [vmem:[#allocation5 + $0x90] sm:$0xff]
        %v589 = vld [vmem:[#allocation5 + $0x98] sm:$0xff]
        %v590 = vld [vmem:[#allocation5 + $0xa0] sm:$0xff]
        %v591 = vld [vmem:[#allocation5 + $0xa8] sm:$0xff]
        %v592 = vld [vmem:[#allocation5 + $0xb0] sm:$0xff]
        %v593 = vld [vmem:[#allocation5 + $0xb8] sm:$0xff]
        %v594 = vld [vmem:[#allocation5 + $0xc0] sm:$0xff]
        %v595 = vld [vmem:[#allocation5 + $0xc8] sm:$0xff]
        %v596 = vld [vmem:[#allocation5 + $0xd0] sm:$0xff]
        %v597 = vld [vmem:[#allocation5 + $0xd8] sm:$0xff]
        %v598 = vld [vmem:[#allocation5 + $0xe0] sm:$0xff]
        %v599 = vld [vmem:[#allocation5 + $0xe8] sm:$0xff]
        %v600 = vld [vmem:[#allocation5 + $0xf0] sm:$0xff]
        %v601 = vld [vmem:[#allocation5 + $0xf8] sm:$0xff]
        %v602 = vld [vmem:[#allocation3] sm:$0xff]
        %v603 = vld [vmem:[#allocation4] sm:$0xff]
        %v604 = vld [vmem:[#allocation2] sm:$0xff]
        %v605 = vld [vmem:[#allocation2 + $0x8] sm:$0xff]
        %v606 = vld [vmem:[#allocation2 + $0x10] sm:$0xff]
        %v607 = vld [vmem:[#allocation2 + $0x18] sm:$0xff]
        %v608 = vpack.c.bf16 %v602, %v602
        %v641 = vunpack.c.l.b16 %v570
        %v642 = vunpack.c.h.b16 %v570
        %v643 = vunpack.c.l.b16 %v571
        %v644 = vunpack.c.h.b16 %v571
        %v645 = vunpack.c.l.b16 %v572
        %v646 = vunpack.c.h.b16 %v572
        %v647 = vunpack.c.l.b16 %v573
        %v648 = vunpack.c.h.b16 %v573
        %v649 = vunpack.c.l.b16 %v574
        %v650 = vunpack.c.h.b16 %v574
        %v651 = vunpack.c.l.b16 %v575
        %v652 = vunpack.c.h.b16 %v575
        %v653 = vunpack.c.l.b16 %v576
        %v654 = vunpack.c.h.b16 %v576
        %v655 = vunpack.c.l.b16 %v577
        %v656 = vunpack.c.h.b16 %v577
        %v657 = vunpack.c.l.b16 %v578
        %v658 = vunpack.c.h.b16 %v578
        %v659 = vunpack.c.l.b16 %v579
        %v660 = vunpack.c.h.b16 %v579
        %v661 = vunpack.c.l.b16 %v580
        %v662 = vunpack.c.h.b16 %v580
        %v663 = vunpack.c.l.b16 %v581
        %v664 = vunpack.c.h.b16 %v581
        %v665 = vunpack.c.l.b16 %v582
        %v666 = vunpack.c.h.b16 %v582
        %v667 = vunpack.c.l.b16 %v583
        %v668 = vunpack.c.h.b16 %v583
        %v669 = vunpack.c.l.b16 %v584
        %v670 = vunpack.c.h.b16 %v584
        %v671 = vunpack.c.l.b16 %v585
        %v672 = vunpack.c.h.b16 %v585
        %v673 = vunpack.c.l.b16 %v586
        %v674 = vunpack.c.h.b16 %v586
        %v675 = vunpack.c.l.b16 %v587
        %v676 = vunpack.c.h.b16 %v587
        %v677 = vunpack.c.l.b16 %v588
        %v678 = vunpack.c.h.b16 %v588
        %v679 = vunpack.c.l.b16 %v589
        %v680 = vunpack.c.h.b16 %v589
        %v681 = vunpack.c.l.b16 %v590
        %v682 = vunpack.c.h.b16 %v590
        %v683 = vunpack.c.l.b16 %v591
        %v684 = vunpack.c.h.b16 %v591
        %v685 = vunpack.c.l.b16 %v592
        %v686 = vunpack.c.h.b16 %v592
        %v687 = vunpack.c.l.b16 %v593
        %v688 = vunpack.c.h.b16 %v593
        %v689 = vunpack.c.l.b16 %v594
        %v690 = vunpack.c.h.b16 %v594
        %v691 = vunpack.c.l.b16 %v595
        %v692 = vunpack.c.h.b16 %v595
        %v693 = vunpack.c.l.b16 %v596
        %v694 = vunpack.c.h.b16 %v596
        %v695 = vunpack.c.l.b16 %v597
        %v696 = vunpack.c.h.b16 %v597
        %v697 = vunpack.c.l.b16 %v598
        %v698 = vunpack.c.h.b16 %v598
        %v699 = vunpack.c.l.b16 %v599
        %v700 = vunpack.c.h.b16 %v599
        %v701 = vunpack.c.l.b16 %v600
        %v702 = vunpack.c.h.b16 %v600
        %v703 = vunpack.c.l.b16 %v601
        %v704 = vunpack.c.h.b16 %v601
        %v705 = vpack.c.b16 %v645, %v641
        %v706 = vpack.c.b16 %v646, %v642
        %v707 = vpack.c.b16 %v647, %v643
        %v708 = vpack.c.b16 %v648, %v644
        %v709 = vpack.c.b16 %v653, %v649
        %v710 = vpack.c.b16 %v654, %v650
        %v711 = vpack.c.b16 %v655, %v651
        %v712 = vpack.c.b16 %v656, %v652
        %v713 = vpack.c.b16 %v661, %v657
        %v714 = vpack.c.b16 %v662, %v658
        %v715 = vpack.c.b16 %v663, %v659
        %v716 = vpack.c.b16 %v664, %v660
        %v717 = vpack.c.b16 %v669, %v665
        %v718 = vpack.c.b16 %v670, %v666
        %v719 = vpack.c.b16 %v671, %v667
        %v720 = vpack.c.b16 %v672, %v668
        %v721 = vpack.c.b16 %v677, %v673
        %v722 = vpack.c.b16 %v678, %v674
        %v723 = vpack.c.b16 %v679, %v675
        %v724 = vpack.c.b16 %v680, %v676
        %v725 = vpack.c.b16 %v685, %v681
        %v726 = vpack.c.b16 %v686, %v682
        %v727 = vpack.c.b16 %v687, %v683
        %v728 = vpack.c.b16 %v688, %v684
        %v729 = vpack.c.b16 %v693, %v689
        %v730 = vpack.c.b16 %v694, %v690
        %v731 = vpack.c.b16 %v695, %v691
        %v732 = vpack.c.b16 %v696, %v692
        %v733 = vpack.c.b16 %v701, %v697
        %v734 = vpack.c.b16 %v702, %v698
        %v735 = vpack.c.b16 %v703, %v699
        %v736 = vpack.c.b16 %v704, %v700
        %769 = vmatpush.bf16.msra.mxu0 %v733
        %770 = vmatpush.bf16.msra.mxu0 %v729
        %771 = vmatpush.bf16.msra.mxu0 %v725
        %772 = vmatpush.bf16.msra.mxu0 %v721
        %773 = vmatpush.bf16.msra.mxu0 %v717
        %774 = vmatpush.bf16.msra.mxu0 %v713
        %775 = vmatpush.bf16.msra.mxu0 %v709
        %776 = vmatpush.bf16.msra.mxu0 %v705
        %777 = vmatmul.bf16.gmra.mxu0 %v608
        %v778 = vpop.f32.mrf.mxu0
        %v779 = vadd.f32 0.0, %v778
        %v780 = vpop.f32.mrf.mxu0
        %781 = vdwg.mxu0
        %782 = vmatpush.bf16.msra.mxu0 %v734
        %783 = vmatpush.bf16.msra.mxu0 %v730
        %784 = vmatpush.bf16.msra.mxu0 %v726
        %785 = vmatpush.bf16.msra.mxu0 %v722
        %786 = vmatpush.bf16.msra.mxu0 %v718
        %787 = vmatpush.bf16.msra.mxu0 %v714
        %788 = vmatpush.bf16.msra.mxu0 %v710
        %789 = vmatpush.bf16.msra.mxu0 %v706
        %790 = vmatmul.bf16.gmra.mxu0 %v608
        %v791 = vpop.f32.mrf.mxu0
        %v792 = vadd.f32 0.0, %v791
        %v793 = vpop.f32.mrf.mxu0
        %794 = vdwg.mxu0
        %795 = vmatpush.bf16.msra.mxu0 %v735
        %796 = vmatpush.bf16.msra.mxu0 %v731
        %797 = vmatpush.bf16.msra.mxu0 %v727
        %798 = vmatpush.bf16.msra.mxu0 %v723
        %799 = vmatpush.bf16.msra.mxu0 %v719
        %800 = vmatpush.bf16.msra.mxu0 %v715
        %801 = vmatpush.bf16.msra.mxu0 %v711
        %802 = vmatpush.bf16.msra.mxu0 %v707
        %803 = vmatmul.bf16.gmra.mxu0 %v608
        %v804 = vpop.f32.mrf.mxu0
        %v805 = vadd.f32 0.0, %v804
        %v806 = vpop.f32.mrf.mxu0
        %807 = vdwg.mxu0
        %808 = vmatpush.bf16.msra.mxu0 %v736
        %809 = vmatpush.bf16.msra.mxu0 %v732
        %810 = vmatpush.bf16.msra.mxu0 %v728
        %811 = vmatpush.bf16.msra.mxu0 %v724
        %812 = vmatpush.bf16.msra.mxu0 %v720
        %813 = vmatpush.bf16.msra.mxu0 %v716
        %814 = vmatpush.bf16.msra.mxu0 %v712
        %815 = vmatpush.bf16.msra.mxu0 %v708
        %816 = vmatmul.bf16.gmra.mxu0 %v608
        %v817 = vpop.f32.mrf.mxu0
        %v818 = vadd.f32 0.0, %v817
        %v819 = vpop.f32.mrf.mxu0
        %820 = vdwg.mxu0
        %v821 = vadd.f32 %v604, %v779
        %v822 = vadd.f32 %v605, %v792
        %v823 = vadd.f32 %v606, %v805
        %v824 = vadd.f32 %v607, %v818
        %v825 = vxor.u32 %v821, 2147483648
        %v826 = vmul.f32 %v825, 1.442695
        %v827 = vpow.pop %v826
        %v828 = vadd.f32 %v827, 1.0
        %v829 = vrcp.pop %v828
        %v830 = vmul.f32 %v828, %v829
        %v831 = vsub.f32 1.0, %v830
        %v832 = vmul.f32 %v829, %v831
        %v833 = vadd.f32 %v829, %v832
        %vm834 = vweird.f32 %v828
        %vm835 = vweird.f32 %v829
        %vm836 = vmor %vm834, %vm835
        %v837 = vsel %vm836, %v829, %v833
        %v838 = vand.u32 2147483647, %v828
        %vm839 = vcmp.eq.f32.partialorder %v838, 8.507059e+37
        %v840 = vand.u32 %v828, 2147483648
        %v841 = vor.u32 1.1754944e-38, %v840
        %v842 = vsel %vm839, %v841, %v837
        %v843 = vmul.f32 1.0, %v842
        %v844 = vxor.u32 %v822, 2147483648
        %v845 = vmul.f32 %v844, 1.442695
        %v846 = vpow.pop %v845
        %v847 = vadd.f32 %v846, 1.0
        %v848 = vrcp.pop %v847
        %v849 = vmul.f32 %v847, %v848
        %v850 = vsub.f32 1.0, %v849
        %v851 = vmul.f32 %v848, %v850
        %v852 = vadd.f32 %v848, %v851
        %vm853 = vweird.f32 %v847
        %vm854 = vweird.f32 %v848
        %vm855 = vmor %vm853, %vm854
        %v856 = vsel %vm855, %v848, %v852
        %v857 = vand.u32 2147483647, %v847
        %vm858 = vcmp.eq.f32.partialorder %v857, 8.507059e+37
        %v859 = vand.u32 %v847, 2147483648
        %v860 = vor.u32 1.1754944e-38, %v859
        %v861 = vsel %vm858, %v860, %v856
        %v862 = vmul.f32 1.0, %v861
        %v863 = vtanh.pop %v823
        %v864 = vxor.u32 %v824, 2147483648
        %v865 = vmul.f32 %v864, 1.442695
        %v866 = vpow.pop %v865
        %v867 = vadd.f32 %v866, 1.0
        %v868 = vrcp.pop %v867
        %v869 = vmul.f32 %v867, %v868
        %v870 = vsub.f32 1.0, %v869
        %v871 = vmul.f32 %v868, %v870
        %v872 = vadd.f32 %v868, %v871
        %vm873 = vweird.f32 %v867
        %vm874 = vweird.f32 %v868
        %vm875 = vmor %vm873, %vm874
        %v876 = vsel %vm875, %v868, %v872
        %v877 = vand.u32 2147483647, %v867
        %vm878 = vcmp.eq.f32.partialorder %v877, 8.507059e+37
        %v879 = vand.u32 %v867, 2147483648
        %v880 = vor.u32 1.1754944e-38, %v879
        %v881 = vsel %vm878, %v880, %v876
        %v882 = vmul.f32 1.0, %v881
        %v883 = vmul.f32 %v862, %v603
        %v884 = vmul.f32 %v843, %v863
        %v885 = vadd.f32 %v883, %v884
        %v886 = vtanh.pop %v885
        %v887 = vmul.f32 %v882, %v886
        %s888 = scalar_lea.vmem [#allocation2], 32
        %v889 = vld [vmem:[%s888] sm:$0xff]
        %v890 = vld [vmem:[%s888 + $0x8] sm:$0xff]
        %v891 = vld [vmem:[%s888 + $0x10] sm:$0xff]
        %v892 = vld [vmem:[%s888 + $0x18] sm:$0xff]
        %v893 = vpack.c.bf16 %v887, %v887
        %894 = vmatpush.bf16.msra.mxu0 %v733
        %895 = vmatpush.bf16.msra.mxu0 %v729
        %896 = vmatpush.bf16.msra.mxu0 %v725
        %897 = vmatpush.bf16.msra.mxu0 %v721
        %898 = vmatpush.bf16.msra.mxu0 %v717
        %899 = vmatpush.bf16.msra.mxu0 %v713
        %900 = vmatpush.bf16.msra.mxu0 %v709
        %901 = vmatpush.bf16.msra.mxu0 %v705
        %902 = vmatmul.bf16.gmra.mxu0 %v893
        %v903 = vpop.f32.mrf.mxu0
        %v904 = vadd.f32 0.0, %v903
        %v905 = vpop.f32.mrf.mxu0
        %906 = vdwg.mxu0
        %907 = vmatpush.bf16.msra.mxu0 %v734
        %908 = vmatpush.bf16.msra.mxu0 %v730
        %909 = vmatpush.bf16.msra.mxu0 %v726
        %910 = vmatpush.bf16.msra.mxu0 %v722
        %911 = vmatpush.bf16.msra.mxu0 %v718
        %912 = vmatpush.bf16.msra.mxu0 %v714
        %913 = vmatpush.bf16.msra.mxu0 %v710
        %914 = vmatpush.bf16.msra.mxu0 %v706
        %915 = vmatmul.bf16.gmra.mxu0 %v893
        %v916 = vpop.f32.mrf.mxu0
        %v917 = vadd.f32 0.0, %v916
        %v918 = vpop.f32.mrf.mxu0
        %919 = vdwg.mxu0
        %920 = vmatpush.bf16.msra.mxu0 %v735
        %921 = vmatpush.bf16.msra.mxu0 %v731
        %922 = vmatpush.bf16.msra.mxu0 %v727
        %923 = vmatpush.bf16.msra.mxu0 %v723
        %924 = vmatpush.bf16.msra.mxu0 %v719
        %925 = vmatpush.bf16.msra.mxu0 %v715
        %926 = vmatpush.bf16.msra.mxu0 %v711
        %927 = vmatpush.bf16.msra.mxu0 %v707
        %928 = vmatmul.bf16.gmra.mxu0 %v893
        %v929 = vpop.f32.mrf.mxu0
        %v930 = vadd.f32 0.0, %v929
        %v931 = vpop.f32.mrf.mxu0
        %932 = vdwg.mxu0
        %933 = vmatpush.bf16.msra.mxu0 %v736
        %934 = vmatpush.bf16.msra.mxu0 %v732
        %935 = vmatpush.bf16.msra.mxu0 %v728
        %936 = vmatpush.bf16.msra.mxu0 %v724
        %937 = vmatpush.bf16.msra.mxu0 %v720
        %938 = vmatpush.bf16.msra.mxu0 %v716
        %939 = vmatpush.bf16.msra.mxu0 %v712
        %940 = vmatpush.bf16.msra.mxu0 %v708
        %941 = vmatmul.bf16.gmra.mxu0 %v893
        %v942 = vpop.f32.mrf.mxu0
        %v943 = vadd.f32 0.0, %v942
        %v944 = vpop.f32.mrf.mxu0
        %945 = vdwg.mxu0
        %v946 = vadd.f32 %v889, %v904
        %v947 = vadd.f32 %v890, %v917
        %v948 = vadd.f32 %v891, %v930
        %v949 = vadd.f32 %v892, %v943
        %v950 = vxor.u32 %v946, 2147483648
        %v951 = vmul.f32 %v950, 1.442695
        %v952 = vpow.pop %v951
        %v953 = vadd.f32 %v952, 1.0
        %v954 = vrcp.pop %v953
        %v955 = vmul.f32 %v953, %v954
        %v956 = vsub.f32 1.0, %v955
        %v957 = vmul.f32 %v954, %v956
        %v958 = vadd.f32 %v954, %v957
        %vm959 = vweird.f32 %v953
        %vm960 = vweird.f32 %v954
        %vm961 = vmor %vm959, %vm960
        %v962 = vsel %vm961, %v954, %v958
        %v963 = vand.u32 2147483647, %v953
        %vm964 = vcmp.eq.f32.partialorder %v963, 8.507059e+37
        %v965 = vand.u32 %v953, 2147483648
        %v966 = vor.u32 1.1754944e-38, %v965
        %v967 = vsel %vm964, %v966, %v962
        %v968 = vmul.f32 1.0, %v967
        %v969 = vxor.u32 %v947, 2147483648
        %v970 = vmul.f32 %v969, 1.442695
        %v971 = vpow.pop %v970
        %v972 = vadd.f32 %v971, 1.0
        %v973 = vrcp.pop %v972
        %v974 = vmul.f32 %v972, %v973
        %v975 = vsub.f32 1.0, %v974
        %v976 = vmul.f32 %v973, %v975
        %v977 = vadd.f32 %v973, %v976
        %vm978 = vweird.f32 %v972
        %vm979 = vweird.f32 %v973
        %vm980 = vmor %vm978, %vm979
        %v981 = vsel %vm980, %v973, %v977
        %v982 = vand.u32 2147483647, %v972
        %vm983 = vcmp.eq.f32.partialorder %v982, 8.507059e+37
        %v984 = vand.u32 %v972, 2147483648
        %v985 = vor.u32 1.1754944e-38, %v984
        %v986 = vsel %vm983, %v985, %v981
        %v987 = vmul.f32 1.0, %v986
        %v988 = vtanh.pop %v948
        %v989 = vxor.u32 %v949, 2147483648
        %v990 = vmul.f32 %v989, 1.442695
        %v991 = vpow.pop %v990
        %v992 = vadd.f32 %v991, 1.0
        %v993 = vrcp.pop %v992
        %v994 = vmul.f32 %v992, %v993
        %v995 = vsub.f32 1.0, %v994
        %v996 = vmul.f32 %v993, %v995
        %v997 = vadd.f32 %v993, %v996
        %vm998 = vweird.f32 %v992
        %vm999 = vweird.f32 %v993
        %vm1000 = vmor %vm998, %vm999
        %v1001 = vsel %vm1000, %v993, %v997
        %v1002 = vand.u32 2147483647, %v992
        %vm1003 = vcmp.eq.f32.partialorder %v1002, 8.507059e+37
        %v1004 = vand.u32 %v992, 2147483648
        %v1005 = vor.u32 1.1754944e-38, %v1004
        %v1006 = vsel %vm1003, %v1005, %v1001
        %v1007 = vmul.f32 1.0, %v1006
        %v1008 = vmul.f32 %v987, %v885
        %v1009 = vmul.f32 %v968, %v988
        %v1010 = vadd.f32 %v1008, %v1009
        %v1011 = vtanh.pop %v1010
        %v1012 = vmul.f32 %v1007, %v1011
        %s1013 = scalar_lea.vmem [#allocation2], 64
        %v1014 = vld [vmem:[%s1013] sm:$0xff]
        %v1015 = vld [vmem:[%s1013 + $0x8] sm:$0xff]
        %v1016 = vld [vmem:[%s1013 + $0x10] sm:$0xff]
        %v1017 = vld [vmem:[%s1013 + $0x18] sm:$0xff]
        %v1018 = vpack.c.bf16 %v1012, %v1012
        %1019 = vmatpush.bf16.msra.mxu0 %v733
        %1020 = vmatpush.bf16.msra.mxu0 %v729
        %1021 = vmatpush.bf16.msra.mxu0 %v725
        %1022 = vmatpush.bf16.msra.mxu0 %v721
        %1023 = vmatpush.bf16.msra.mxu0 %v717
        %1024 = vmatpush.bf16.msra.mxu0 %v713
        %1025 = vmatpush.bf16.msra.mxu0 %v709
        %1026 = vmatpush.bf16.msra.mxu0 %v705
        %1027 = vmatmul.bf16.gmra.mxu0 %v1018
        %v1028 = vpop.f32.mrf.mxu0
        %v1029 = vadd.f32 0.0, %v1028
        %v1030 = vpop.f32.mrf.mxu0
        %1031 = vdwg.mxu0
        %1032 = vmatpush.bf16.msra.mxu0 %v734
        %1033 = vmatpush.bf16.msra.mxu0 %v730
        %1034 = vmatpush.bf16.msra.mxu0 %v726
        %1035 = vmatpush.bf16.msra.mxu0 %v722
        %1036 = vmatpush.bf16.msra.mxu0 %v718
        %1037 = vmatpush.bf16.msra.mxu0 %v714
        %1038 = vmatpush.bf16.msra.mxu0 %v710
        %1039 = vmatpush.bf16.msra.mxu0 %v706
        %1040 = vmatmul.bf16.gmra.mxu0 %v1018
        %v1041 = vpop.f32.mrf.mxu0
        %v1042 = vadd.f32 0.0, %v1041
        %v1043 = vpop.f32.mrf.mxu0
        %1044 = vdwg.mxu0
        %1045 = vmatpush.bf16.msra.mxu0 %v735
        %1046 = vmatpush.bf16.msra.mxu0 %v731
        %1047 = vmatpush.bf16.msra.mxu0 %v727
        %1048 = vmatpush.bf16.msra.mxu0 %v723
        %1049 = vmatpush.bf16.msra.mxu0 %v719
        %1050 = vmatpush.bf16.msra.mxu0 %v715
        %1051 = vmatpush.bf16.msra.mxu0 %v711
        %1052 = vmatpush.bf16.msra.mxu0 %v707
        %1053 = vmatmul.bf16.gmra.mxu0 %v1018
        %v1054 = vpop.f32.mrf.mxu0
        %v1055 = vadd.f32 0.0, %v1054
        %v1056 = vpop.f32.mrf.mxu0
        %1057 = vdwg.mxu0
        %1058 = vmatpush.bf16.msra.mxu0 %v736
        %1059 = vmatpush.bf16.msra.mxu0 %v732
        %1060 = vmatpush.bf16.msra.mxu0 %v728
        %1061 = vmatpush.bf16.msra.mxu0 %v724
        %1062 = vmatpush.bf16.msra.mxu0 %v720
        %1063 = vmatpush.bf16.msra.mxu0 %v716
        %1064 = vmatpush.bf16.msra.mxu0 %v712
        %1065 = vmatpush.bf16.msra.mxu0 %v708
        %1066 = vmatmul.bf16.gmra.mxu0 %v1018
        %v1067 = vpop.f32.mrf.mxu0
        %v1068 = vadd.f32 0.0, %v1067
        %v1069 = vpop.f32.mrf.mxu0
        %1070 = vdwg.mxu0
        %v1071 = vadd.f32 %v1014, %v1029
        %v1072 = vadd.f32 %v1015, %v1042
        %v1073 = vadd.f32 %v1016, %v1055
        %v1074 = vadd.f32 %v1017, %v1068
        %v1075 = vxor.u32 %v1071, 2147483648
        %v1076 = vmul.f32 %v1075, 1.442695
        %v1077 = vpow.pop %v1076
        %v1078 = vadd.f32 %v1077, 1.0
        %v1079 = vrcp.pop %v1078
        %v1080 = vmul.f32 %v1078, %v1079
        %v1081 = vsub.f32 1.0, %v1080
        %v1082 = vmul.f32 %v1079, %v1081
        %v1083 = vadd.f32 %v1079, %v1082
        %vm1084 = vweird.f32 %v1078
        %vm1085 = vweird.f32 %v1079
        %vm1086 = vmor %vm1084, %vm1085
        %v1087 = vsel %vm1086, %v1079, %v1083
        %v1088 = vand.u32 2147483647, %v1078
        %vm1089 = vcmp.eq.f32.partialorder %v1088, 8.507059e+37
        %v1090 = vand.u32 %v1078, 2147483648
        %v1091 = vor.u32 1.1754944e-38, %v1090
        %v1092 = vsel %vm1089, %v1091, %v1087
        %v1093 = vmul.f32 1.0, %v1092
        %v1094 = vxor.u32 %v1072, 2147483648
        %v1095 = vmul.f32 %v1094, 1.442695
        %v1096 = vpow.pop %v1095
        %v1097 = vadd.f32 %v1096, 1.0
        %v1098 = vrcp.pop %v1097
        %v1099 = vmul.f32 %v1097, %v1098
        %v1100 = vsub.f32 1.0, %v1099
        %v1101 = vmul.f32 %v1098, %v1100
        %v1102 = vadd.f32 %v1098, %v1101
        %vm1103 = vweird.f32 %v1097
        %vm1104 = vweird.f32 %v1098
        %vm1105 = vmor %vm1103, %vm1104
        %v1106 = vsel %vm1105, %v1098, %v1102
        %v1107 = vand.u32 2147483647, %v1097
        %vm1108 = vcmp.eq.f32.partialorder %v1107, 8.507059e+37
        %v1109 = vand.u32 %v1097, 2147483648
        %v1110 = vor.u32 1.1754944e-38, %v1109
        %v1111 = vsel %vm1108, %v1110, %v1106
        %v1112 = vmul.f32 1.0, %v1111
        %v1113 = vtanh.pop %v1073
        %v1114 = vxor.u32 %v1074, 2147483648
        %v1115 = vmul.f32 %v1114, 1.442695
        %v1116 = vpow.pop %v1115
        %v1117 = vadd.f32 %v1116, 1.0
        %v1118 = vrcp.pop %v1117
        %v1119 = vmul.f32 %v1117, %v1118
        %v1120 = vsub.f32 1.0, %v1119
        %v1121 = vmul.f32 %v1118, %v1120
        %v1122 = vadd.f32 %v1118, %v1121
        %vm1123 = vweird.f32 %v1117
        %vm1124 = vweird.f32 %v1118
        %vm1125 = vmor %vm1123, %vm1124
        %v1126 = vsel %vm1125, %v1118, %v1122
        %v1127 = vand.u32 2147483647, %v1117
        %vm1128 = vcmp.eq.f32.partialorder %v1127, 8.507059e+37
        %v1129 = vand.u32 %v1117, 2147483648
        %v1130 = vor.u32 1.1754944e-38, %v1129
        %v1131 = vsel %vm1128, %v1130, %v1126
        %v1132 = vmul.f32 1.0, %v1131
        %v1133 = vmul.f32 %v1112, %v1010
        %v1134 = vmul.f32 %v1093, %v1113
        %v1135 = vadd.f32 %v1133, %v1134
        %v1136 = vtanh.pop %v1135
        %v1137 = vmul.f32 %v1132, %v1136
        %s1138 = scalar_lea.vmem [#allocation2], 96
        %v1139 = vld [vmem:[%s1138] sm:$0xff]
        %v1140 = vld [vmem:[%s1138 + $0x8] sm:$0xff]
        %v1141 = vld [vmem:[%s1138 + $0x10] sm:$0xff]
        %v1142 = vld [vmem:[%s1138 + $0x18] sm:$0xff]
        %v1143 = vpack.c.bf16 %v1137, %v1137
        %1144 = vmatpush.bf16.msra.mxu0 %v733
        %1145 = vmatpush.bf16.msra.mxu0 %v729
        %1146 = vmatpush.bf16.msra.mxu0 %v725
        %1147 = vmatpush.bf16.msra.mxu0 %v721
        %1148 = vmatpush.bf16.msra.mxu0 %v717
        %1149 = vmatpush.bf16.msra.mxu0 %v713
        %1150 = vmatpush.bf16.msra.mxu0 %v709
        %1151 = vmatpush.bf16.msra.mxu0 %v705
        %1152 = vmatmul.bf16.gmra.mxu0 %v1143
        %v1153 = vpop.f32.mrf.mxu0
        %v1154 = vadd.f32 0.0, %v1153
        %v1155 = vpop.f32.mrf.mxu0
        %1156 = vdwg.mxu0
        %1157 = vmatpush.bf16.msra.mxu0 %v734
        %1158 = vmatpush.bf16.msra.mxu0 %v730
        %1159 = vmatpush.bf16.msra.mxu0 %v726
        %1160 = vmatpush.bf16.msra.mxu0 %v722
        %1161 = vmatpush.bf16.msra.mxu0 %v718
        %1162 = vmatpush.bf16.msra.mxu0 %v714
        %1163 = vmatpush.bf16.msra.mxu0 %v710
        %1164 = vmatpush.bf16.msra.mxu0 %v706
        %1165 = vmatmul.bf16.gmra.mxu0 %v1143
        %v1166 = vpop.f32.mrf.mxu0
        %v1167 = vadd.f32 0.0, %v1166
        %v1168 = vpop.f32.mrf.mxu0
        %1169 = vdwg.mxu0
        %1170 = vmatpush.bf16.msra.mxu0 %v735
        %1171 = vmatpush.bf16.msra.mxu0 %v731
        %1172 = vmatpush.bf16.msra.mxu0 %v727
        %1173 = vmatpush.bf16.msra.mxu0 %v723
        %1174 = vmatpush.bf16.msra.mxu0 %v719
        %1175 = vmatpush.bf16.msra.mxu0 %v715
        %1176 = vmatpush.bf16.msra.mxu0 %v711
        %1177 = vmatpush.bf16.msra.mxu0 %v707
        %1178 = vmatmul.bf16.gmra.mxu0 %v1143
        %v1179 = vpop.f32.mrf.mxu0
        %v1180 = vadd.f32 0.0, %v1179
        %v1181 = vpop.f32.mrf.mxu0
        %1182 = vdwg.mxu0
        %1183 = vmatpush.bf16.msra.mxu0 %v736
        %1184 = vmatpush.bf16.msra.mxu0 %v732
        %1185 = vmatpush.bf16.msra.mxu0 %v728
        %1186 = vmatpush.bf16.msra.mxu0 %v724
        %1187 = vmatpush.bf16.msra.mxu0 %v720
        %1188 = vmatpush.bf16.msra.mxu0 %v716
        %1189 = vmatpush.bf16.msra.mxu0 %v712
        %1190 = vmatpush.bf16.msra.mxu0 %v708
        %1191 = vmatmul.bf16.gmra.mxu0 %v1143
        %v1192 = vpop.f32.mrf.mxu0
        %v1193 = vadd.f32 0.0, %v1192
        %v1194 = vpop.f32.mrf.mxu0
        %1195 = vdwg.mxu0
        %v1196 = vadd.f32 %v1139, %v1154
        %v1197 = vadd.f32 %v1140, %v1167
        %v1198 = vadd.f32 %v1141, %v1180
        %v1199 = vadd.f32 %v1142, %v1193
        %v1200 = vxor.u32 %v1196, 2147483648
        %v1201 = vmul.f32 %v1200, 1.442695
        %v1202 = vpow.pop %v1201
        %v1203 = vadd.f32 %v1202, 1.0
        %v1204 = vrcp.pop %v1203
        %v1205 = vmul.f32 %v1203, %v1204
        %v1206 = vsub.f32 1.0, %v1205
        %v1207 = vmul.f32 %v1204, %v1206
        %v1208 = vadd.f32 %v1204, %v1207
        %vm1209 = vweird.f32 %v1203
        %vm1210 = vweird.f32 %v1204
        %vm1211 = vmor %vm1209, %vm1210
        %v1212 = vsel %vm1211, %v1204, %v1208
        %v1213 = vand.u32 2147483647, %v1203
        %vm1214 = vcmp.eq.f32.partialorder %v1213, 8.507059e+37
        %v1215 = vand.u32 %v1203, 2147483648
        %v1216 = vor.u32 1.1754944e-38, %v1215
        %v1217 = vsel %vm1214, %v1216, %v1212
        %v1218 = vmul.f32 1.0, %v1217
        %v1219 = vxor.u32 %v1197, 2147483648
        %v1220 = vmul.f32 %v1219, 1.442695
        %v1221 = vpow.pop %v1220
        %v1222 = vadd.f32 %v1221, 1.0
        %v1223 = vrcp.pop %v1222
        %v1224 = vmul.f32 %v1222, %v1223
        %v1225 = vsub.f32 1.0, %v1224
        %v1226 = vmul.f32 %v1223, %v1225
        %v1227 = vadd.f32 %v1223, %v1226
        %vm1228 = vweird.f32 %v1222
        %vm1229 = vweird.f32 %v1223
        %vm1230 = vmor %vm1228, %vm1229
        %v1231 = vsel %vm1230, %v1223, %v1227
        %v1232 = vand.u32 2147483647, %v1222
        %vm1233 = vcmp.eq.f32.partialorder %v1232, 8.507059e+37
        %v1234 = vand.u32 %v1222, 2147483648
        %v1235 = vor.u32 1.1754944e-38, %v1234
        %v1236 = vsel %vm1233, %v1235, %v1231
        %v1237 = vmul.f32 1.0, %v1236
        %v1238 = vtanh.pop %v1198
        %v1239 = vxor.u32 %v1199, 2147483648
        %v1240 = vmul.f32 %v1239, 1.442695
        %v1241 = vpow.pop %v1240
        %v1242 = vadd.f32 %v1241, 1.0
        %v1243 = vrcp.pop %v1242
        %v1244 = vmul.f32 %v1242, %v1243
        %v1245 = vsub.f32 1.0, %v1244
        %v1246 = vmul.f32 %v1243, %v1245
        %v1247 = vadd.f32 %v1243, %v1246
        %vm1248 = vweird.f32 %v1242
        %vm1249 = vweird.f32 %v1243
        %vm1250 = vmor %vm1248, %vm1249
        %v1251 = vsel %vm1250, %v1243, %v1247
        %v1252 = vand.u32 2147483647, %v1242
        %vm1253 = vcmp.eq.f32.partialorder %v1252, 8.507059e+37
        %v1254 = vand.u32 %v1242, 2147483648
        %v1255 = vor.u32 1.1754944e-38, %v1254
        %v1256 = vsel %vm1253, %v1255, %v1251
        %v1257 = vmul.f32 1.0, %v1256
        %v1258 = vmul.f32 %v1237, %v1135
        %v1259 = vmul.f32 %v1218, %v1238
        %v1260 = vadd.f32 %v1258, %v1259
        %v1261 = vtanh.pop %v1260
        %v1262 = vmul.f32 %v1257, %v1261
        %s1263 = scalar_lea.vmem [#allocation2], 128
        %v1264 = vld [vmem:[%s1263] sm:$0xff]
        %v1265 = vld [vmem:[%s1263 + $0x8] sm:$0xff]
        %v1266 = vld [vmem:[%s1263 + $0x10] sm:$0xff]
        %v1267 = vld [vmem:[%s1263 + $0x18] sm:$0xff]
        %v1268 = vpack.c.bf16 %v1262, %v1262
        %1269 = vmatpush.bf16.msra.mxu0 %v733
        %1270 = vmatpush.bf16.msra.mxu0 %v729
        %1271 = vmatpush.bf16.msra.mxu0 %v725
        %1272 = vmatpush.bf16.msra.mxu0 %v721
        %1273 = vmatpush.bf16.msra.mxu0 %v717
        %1274 = vmatpush.bf16.msra.mxu0 %v713
        %1275 = vmatpush.bf16.msra.mxu0 %v709
        %1276 = vmatpush.bf16.msra.mxu0 %v705
        %1277 = vmatmul.bf16.gmra.mxu0 %v1268
        %v1278 = vpop.f32.mrf.mxu0
        %v1279 = vadd.f32 0.0, %v1278
        %v1280 = vpop.f32.mrf.mxu0
        %1281 = vdwg.mxu0
        %1282 = vmatpush.bf16.msra.mxu0 %v734
        %1283 = vmatpush.bf16.msra.mxu0 %v730
        %1284 = vmatpush.bf16.msra.mxu0 %v726
        %1285 = vmatpush.bf16.msra.mxu0 %v722
        %1286 = vmatpush.bf16.msra.mxu0 %v718
        %1287 = vmatpush.bf16.msra.mxu0 %v714
        %1288 = vmatpush.bf16.msra.mxu0 %v710
        %1289 = vmatpush.bf16.msra.mxu0 %v706
        %1290 = vmatmul.bf16.gmra.mxu0 %v1268
        %v1291 = vpop.f32.mrf.mxu0
        %v1292 = vadd.f32 0.0, %v1291
        %v1293 = vpop.f32.mrf.mxu0
        %1294 = vdwg.mxu0
        %1295 = vmatpush.bf16.msra.mxu0 %v735
        %1296 = vmatpush.bf16.msra.mxu0 %v731
        %1297 = vmatpush.bf16.msra.mxu0 %v727
        %1298 = vmatpush.bf16.msra.mxu0 %v723
        %1299 = vmatpush.bf16.msra.mxu0 %v719
        %1300 = vmatpush.bf16.msra.mxu0 %v715
        %1301 = vmatpush.bf16.msra.mxu0 %v711
        %1302 = vmatpush.bf16.msra.mxu0 %v707
        %1303 = vmatmul.bf16.gmra.mxu0 %v1268
        %v1304 = vpop.f32.mrf.mxu0
        %v1305 = vadd.f32 0.0, %v1304
        %v1306 = vpop.f32.mrf.mxu0
        %1307 = vdwg.mxu0
        %1308 = vmatpush.bf16.msra.mxu0 %v736
        %1309 = vmatpush.bf16.msra.mxu0 %v732
        %1310 = vmatpush.bf16.msra.mxu0 %v728
        %1311 = vmatpush.bf16.msra.mxu0 %v724
        %1312 = vmatpush.bf16.msra.mxu0 %v720
        %1313 = vmatpush.bf16.msra.mxu0 %v716
        %1314 = vmatpush.bf16.msra.mxu0 %v712
        %1315 = vmatpush.bf16.msra.mxu0 %v708
        %1316 = vmatmul.bf16.gmra.mxu0 %v1268
        %v1317 = vpop.f32.mrf.mxu0
        %v1318 = vadd.f32 0.0, %v1317
        %v1319 = vpop.f32.mrf.mxu0
        %1320 = vdwg.mxu0
        %v1321 = vadd.f32 %v1264, %v1279
        %v1322 = vadd.f32 %v1265, %v1292
        %v1323 = vadd.f32 %v1266, %v1305
        %v1324 = vadd.f32 %v1267, %v1318
        %v1325 = vxor.u32 %v1321, 2147483648
        %v1326 = vmul.f32 %v1325, 1.442695
        %v1327 = vpow.pop %v1326
        %v1328 = vadd.f32 %v1327, 1.0
        %v1329 = vrcp.pop %v1328
        %v1330 = vmul.f32 %v1328, %v1329
        %v1331 = vsub.f32 1.0, %v1330
        %v1332 = vmul.f32 %v1329, %v1331
        %v1333 = vadd.f32 %v1329, %v1332
        %vm1334 = vweird.f32 %v1328
        %vm1335 = vweird.f32 %v1329
        %vm1336 = vmor %vm1334, %vm1335
        %v1337 = vsel %vm1336, %v1329, %v1333
        %v1338 = vand.u32 2147483647, %v1328
        %vm1339 = vcmp.eq.f32.partialorder %v1338, 8.507059e+37
        %v1340 = vand.u32 %v1328, 2147483648
        %v1341 = vor.u32 1.1754944e-38, %v1340
        %v1342 = vsel %vm1339, %v1341, %v1337
        %v1343 = vmul.f32 1.0, %v1342
        %v1344 = vxor.u32 %v1322, 2147483648
        %v1345 = vmul.f32 %v1344, 1.442695
        %v1346 = vpow.pop %v1345
        %v1347 = vadd.f32 %v1346, 1.0
        %v1348 = vrcp.pop %v1347
        %v1349 = vmul.f32 %v1347, %v1348
        %v1350 = vsub.f32 1.0, %v1349
        %v1351 = vmul.f32 %v1348, %v1350
        %v1352 = vadd.f32 %v1348, %v1351
        %vm1353 = vweird.f32 %v1347
        %vm1354 = vweird.f32 %v1348
        %vm1355 = vmor %vm1353, %vm1354
        %v1356 = vsel %vm1355, %v1348, %v1352
        %v1357 = vand.u32 2147483647, %v1347
        %vm1358 = vcmp.eq.f32.partialorder %v1357, 8.507059e+37
        %v1359 = vand.u32 %v1347, 2147483648
        %v1360 = vor.u32 1.1754944e-38, %v1359
        %v1361 = vsel %vm1358, %v1360, %v1356
        %v1362 = vmul.f32 1.0, %v1361
        %v1363 = vtanh.pop %v1323
        %v1364 = vxor.u32 %v1324, 2147483648
        %v1365 = vmul.f32 %v1364, 1.442695
        %v1366 = vpow.pop %v1365
        %v1367 = vadd.f32 %v1366, 1.0
        %v1368 = vrcp.pop %v1367
        %v1369 = vmul.f32 %v1367, %v1368
        %v1370 = vsub.f32 1.0, %v1369
        %v1371 = vmul.f32 %v1368, %v1370
        %v1372 = vadd.f32 %v1368, %v1371
        %vm1373 = vweird.f32 %v1367
        %vm1374 = vweird.f32 %v1368
        %vm1375 = vmor %vm1373, %vm1374
        %v1376 = vsel %vm1375, %v1368, %v1372
        %v1377 = vand.u32 2147483647, %v1367
        %vm1378 = vcmp.eq.f32.partialorder %v1377, 8.507059e+37
        %v1379 = vand.u32 %v1367, 2147483648
        %v1380 = vor.u32 1.1754944e-38, %v1379
        %v1381 = vsel %vm1378, %v1380, %v1376
        %v1382 = vmul.f32 1.0, %v1381
        %v1383 = vmul.f32 %v1362, %v1260
        %v1384 = vmul.f32 %v1343, %v1363
        %v1385 = vadd.f32 %v1383, %v1384
        %v1386 = vtanh.pop %v1385
        %v1387 = vmul.f32 %v1382, %v1386
        %s1388 = scalar_lea.vmem [#allocation2], 160
        %v1389 = vld [vmem:[%s1388] sm:$0xff]
        %v1390 = vld [vmem:[%s1388 + $0x8] sm:$0xff]
        %v1391 = vld [vmem:[%s1388 + $0x10] sm:$0xff]
        %v1392 = vld [vmem:[%s1388 + $0x18] sm:$0xff]
        %v1393 = vpack.c.bf16 %v1387, %v1387
        %1394 = vmatpush.bf16.msra.mxu0 %v733
        %1395 = vmatpush.bf16.msra.mxu0 %v729
        %1396 = vmatpush.bf16.msra.mxu0 %v725
        %1397 = vmatpush.bf16.msra.mxu0 %v721
        %1398 = vmatpush.bf16.msra.mxu0 %v717
        %1399 = vmatpush.bf16.msra.mxu0 %v713
        %1400 = vmatpush.bf16.msra.mxu0 %v709
        %1401 = vmatpush.bf16.msra.mxu0 %v705
        %1402 = vmatmul.bf16.gmra.mxu0 %v1393
        %v1403 = vpop.f32.mrf.mxu0
        %v1404 = vadd.f32 0.0, %v1403
        %v1405 = vpop.f32.mrf.mxu0
        %1406 = vdwg.mxu0
        %1407 = vmatpush.bf16.msra.mxu0 %v734
        %1408 = vmatpush.bf16.msra.mxu0 %v730
        %1409 = vmatpush.bf16.msra.mxu0 %v726
        %1410 = vmatpush.bf16.msra.mxu0 %v722
        %1411 = vmatpush.bf16.msra.mxu0 %v718
        %1412 = vmatpush.bf16.msra.mxu0 %v714
        %1413 = vmatpush.bf16.msra.mxu0 %v710
        %1414 = vmatpush.bf16.msra.mxu0 %v706
        %1415 = vmatmul.bf16.gmra.mxu0 %v1393
        %v1416 = vpop.f32.mrf.mxu0
        %v1417 = vadd.f32 0.0, %v1416
        %v1418 = vpop.f32.mrf.mxu0
        %1419 = vdwg.mxu0
        %1420 = vmatpush.bf16.msra.mxu0 %v735
        %1421 = vmatpush.bf16.msra.mxu0 %v731
        %1422 = vmatpush.bf16.msra.mxu0 %v727
        %1423 = vmatpush.bf16.msra.mxu0 %v723
        %1424 = vmatpush.bf16.msra.mxu0 %v719
        %1425 = vmatpush.bf16.msra.mxu0 %v715
        %1426 = vmatpush.bf16.msra.mxu0 %v711
        %1427 = vmatpush.bf16.msra.mxu0 %v707
        %1428 = vmatmul.bf16.gmra.mxu0 %v1393
        %v1429 = vpop.f32.mrf.mxu0
        %v1430 = vadd.f32 0.0, %v1429
        %v1431 = vpop.f32.mrf.mxu0
        %1432 = vdwg.mxu0
        %1433 = vmatpush.bf16.msra.mxu0 %v736
        %1434 = vmatpush.bf16.msra.mxu0 %v732
        %1435 = vmatpush.bf16.msra.mxu0 %v728
        %1436 = vmatpush.bf16.msra.mxu0 %v724
        %1437 = vmatpush.bf16.msra.mxu0 %v720
        %1438 = vmatpush.bf16.msra.mxu0 %v716
        %1439 = vmatpush.bf16.msra.mxu0 %v712
        %1440 = vmatpush.bf16.msra.mxu0 %v708
        %1441 = vmatmul.bf16.gmra.mxu0 %v1393
        %v1442 = vpop.f32.mrf.mxu0
        %v1443 = vadd.f32 0.0, %v1442
        %v1444 = vpop.f32.mrf.mxu0
        %1445 = vdwg.mxu0
        %v1446 = vadd.f32 %v1389, %v1404
        %v1447 = vadd.f32 %v1390, %v1417
        %v1448 = vadd.f32 %v1391, %v1430
        %v1449 = vadd.f32 %v1392, %v1443
        %v1450 = vxor.u32 %v1446, 2147483648
        %v1451 = vmul.f32 %v1450, 1.442695
        %v1452 = vpow.pop %v1451
        %v1453 = vadd.f32 %v1452, 1.0
        %v1454 = vrcp.pop %v1453
        %v1455 = vmul.f32 %v1453, %v1454
        %v1456 = vsub.f32 1.0, %v1455
        %v1457 = vmul.f32 %v1454, %v1456
        %v1458 = vadd.f32 %v1454, %v1457
        %vm1459 = vweird.f32 %v1453
        %vm1460 = vweird.f32 %v1454
        %vm1461 = vmor %vm1459, %vm1460
        %v1462 = vsel %vm1461, %v1454, %v1458
        %v1463 = vand.u32 2147483647, %v1453
        %vm1464 = vcmp.eq.f32.partialorder %v1463, 8.507059e+37
        %v1465 = vand.u32 %v1453, 2147483648
        %v1466 = vor.u32 1.1754944e-38, %v1465
        %v1467 = vsel %vm1464, %v1466, %v1462
        %v1468 = vmul.f32 1.0, %v1467
        %v1469 = vxor.u32 %v1447, 2147483648
        %v1470 = vmul.f32 %v1469, 1.442695
        %v1471 = vpow.pop %v1470
        %v1472 = vadd.f32 %v1471, 1.0
        %v1473 = vrcp.pop %v1472
        %v1474 = vmul.f32 %v1472, %v1473
        %v1475 = vsub.f32 1.0, %v1474
        %v1476 = vmul.f32 %v1473, %v1475
        %v1477 = vadd.f32 %v1473, %v1476
        %vm1478 = vweird.f32 %v1472
        %vm1479 = vweird.f32 %v1473
        %vm1480 = vmor %vm1478, %vm1479
        %v1481 = vsel %vm1480, %v1473, %v1477
        %v1482 = vand.u32 2147483647, %v1472
        %vm1483 = vcmp.eq.f32.partialorder %v1482, 8.507059e+37
        %v1484 = vand.u32 %v1472, 2147483648
        %v1485 = vor.u32 1.1754944e-38, %v1484
        %v1486 = vsel %vm1483, %v1485, %v1481
        %v1487 = vmul.f32 1.0, %v1486
        %v1488 = vtanh.pop %v1448
        %v1489 = vxor.u32 %v1449, 2147483648
        %v1490 = vmul.f32 %v1489, 1.442695
        %v1491 = vpow.pop %v1490
        %v1492 = vadd.f32 %v1491, 1.0
        %v1493 = vrcp.pop %v1492
        %v1494 = vmul.f32 %v1492, %v1493
        %v1495 = vsub.f32 1.0, %v1494
        %v1496 = vmul.f32 %v1493, %v1495
        %v1497 = vadd.f32 %v1493, %v1496
        %vm1498 = vweird.f32 %v1492
        %vm1499 = vweird.f32 %v1493
        %vm1500 = vmor %vm1498, %vm1499
        %v1501 = vsel %vm1500, %v1493, %v1497
        %v1502 = vand.u32 2147483647, %v1492
        %vm1503 = vcmp.eq.f32.partialorder %v1502, 8.507059e+37
        %v1504 = vand.u32 %v1492, 2147483648
        %v1505 = vor.u32 1.1754944e-38, %v1504
        %v1506 = vsel %vm1503, %v1505, %v1501
        %v1507 = vmul.f32 1.0, %v1506
        %v1508 = vmul.f32 %v1487, %v1385
        %v1509 = vmul.f32 %v1468, %v1488
        %v1510 = vadd.f32 %v1508, %v1509
        %v1511 = vtanh.pop %v1510
        %v1512 = vmul.f32 %v1507, %v1511
        %s1513 = scalar_lea.vmem [#allocation2], 192
        %v1514 = vld [vmem:[%s1513] sm:$0xff]
        %v1515 = vld [vmem:[%s1513 + $0x8] sm:$0xff]
        %v1516 = vld [vmem:[%s1513 + $0x10] sm:$0xff]
        %v1517 = vld [vmem:[%s1513 + $0x18] sm:$0xff]
        %v1518 = vpack.c.bf16 %v1512, %v1512
        %1519 = vmatpush.bf16.msra.mxu0 %v733
        %1520 = vmatpush.bf16.msra.mxu0 %v729
        %1521 = vmatpush.bf16.msra.mxu0 %v725
        %1522 = vmatpush.bf16.msra.mxu0 %v721
        %1523 = vmatpush.bf16.msra.mxu0 %v717
        %1524 = vmatpush.bf16.msra.mxu0 %v713
        %1525 = vmatpush.bf16.msra.mxu0 %v709
        %1526 = vmatpush.bf16.msra.mxu0 %v705
        %1527 = vmatmul.bf16.gmra.mxu0 %v1518
        %v1528 = vpop.f32.mrf.mxu0
        %v1529 = vadd.f32 0.0, %v1528
        %v1530 = vpop.f32.mrf.mxu0
        %1531 = vdwg.mxu0
        %1532 = vmatpush.bf16.msra.mxu0 %v734
        %1533 = vmatpush.bf16.msra.mxu0 %v730
        %1534 = vmatpush.bf16.msra.mxu0 %v726
        %1535 = vmatpush.bf16.msra.mxu0 %v722
        %1536 = vmatpush.bf16.msra.mxu0 %v718
        %1537 = vmatpush.bf16.msra.mxu0 %v714
        %1538 = vmatpush.bf16.msra.mxu0 %v710
        %1539 = vmatpush.bf16.msra.mxu0 %v706
        %1540 = vmatmul.bf16.gmra.mxu0 %v1518
        %v1541 = vpop.f32.mrf.mxu0
        %v1542 = vadd.f32 0.0, %v1541
        %v1543 = vpop.f32.mrf.mxu0
        %1544 = vdwg.mxu0
        %1545 = vmatpush.bf16.msra.mxu0 %v735
        %1546 = vmatpush.bf16.msra.mxu0 %v731
        %1547 = vmatpush.bf16.msra.mxu0 %v727
        %1548 = vmatpush.bf16.msra.mxu0 %v723
        %1549 = vmatpush.bf16.msra.mxu0 %v719
        %1550 = vmatpush.bf16.msra.mxu0 %v715
        %1551 = vmatpush.bf16.msra.mxu0 %v711
        %1552 = vmatpush.bf16.msra.mxu0 %v707
        %1553 = vmatmul.bf16.gmra.mxu0 %v1518
        %v1554 = vpop.f32.mrf.mxu0
        %v1555 = vadd.f32 0.0, %v1554
        %v1556 = vpop.f32.mrf.mxu0
        %1557 = vdwg.mxu0
        %1558 = vmatpush.bf16.msra.mxu0 %v736
        %1559 = vmatpush.bf16.msra.mxu0 %v732
        %1560 = vmatpush.bf16.msra.mxu0 %v728
        %1561 = vmatpush.bf16.msra.mxu0 %v724
        %1562 = vmatpush.bf16.msra.mxu0 %v720
        %1563 = vmatpush.bf16.msra.mxu0 %v716
        %1564 = vmatpush.bf16.msra.mxu0 %v712
        %1565 = vmatpush.bf16.msra.mxu0 %v708
        %1566 = vmatmul.bf16.gmra.mxu0 %v1518
        %v1567 = vpop.f32.mrf.mxu0
        %v1568 = vadd.f32 0.0, %v1567
        %v1569 = vpop.f32.mrf.mxu0
        %1570 = vdwg.mxu0
        %v1571 = vadd.f32 %v1514, %v1529
        %v1572 = vadd.f32 %v1515, %v1542
        %v1573 = vadd.f32 %v1516, %v1555
        %v1574 = vadd.f32 %v1517, %v1568
        %v1575 = vxor.u32 %v1571, 2147483648
        %v1576 = vmul.f32 %v1575, 1.442695
        %v1577 = vpow.pop %v1576
        %v1578 = vadd.f32 %v1577, 1.0
        %v1579 = vrcp.pop %v1578
        %v1580 = vmul.f32 %v1578, %v1579
        %v1581 = vsub.f32 1.0, %v1580
        %v1582 = vmul.f32 %v1579, %v1581
        %v1583 = vadd.f32 %v1579, %v1582
        %vm1584 = vweird.f32 %v1578
        %vm1585 = vweird.f32 %v1579
        %vm1586 = vmor %vm1584, %vm1585
        %v1587 = vsel %vm1586, %v1579, %v1583
        %v1588 = vand.u32 2147483647, %v1578
        %vm1589 = vcmp.eq.f32.partialorder %v1588, 8.507059e+37
        %v1590 = vand.u32 %v1578, 2147483648
        %v1591 = vor.u32 1.1754944e-38, %v1590
        %v1592 = vsel %vm1589, %v1591, %v1587
        %v1593 = vmul.f32 1.0, %v1592
        %v1594 = vxor.u32 %v1572, 2147483648
        %v1595 = vmul.f32 %v1594, 1.442695
        %v1596 = vpow.pop %v1595
        %v1597 = vadd.f32 %v1596, 1.0
        %v1598 = vrcp.pop %v1597
        %v1599 = vmul.f32 %v1597, %v1598
        %v1600 = vsub.f32 1.0, %v1599
        %v1601 = vmul.f32 %v1598, %v1600
        %v1602 = vadd.f32 %v1598, %v1601
        %vm1603 = vweird.f32 %v1597
        %vm1604 = vweird.f32 %v1598
        %vm1605 = vmor %vm1603, %vm1604
        %v1606 = vsel %vm1605, %v1598, %v1602
        %v1607 = vand.u32 2147483647, %v1597
        %vm1608 = vcmp.eq.f32.partialorder %v1607, 8.507059e+37
        %v1609 = vand.u32 %v1597, 2147483648
        %v1610 = vor.u32 1.1754944e-38, %v1609
        %v1611 = vsel %vm1608, %v1610, %v1606
        %v1612 = vmul.f32 1.0, %v1611
        %v1613 = vtanh.pop %v1573
        %v1614 = vxor.u32 %v1574, 2147483648
        %v1615 = vmul.f32 %v1614, 1.442695
        %v1616 = vpow.pop %v1615
        %v1617 = vadd.f32 %v1616, 1.0
        %v1618 = vrcp.pop %v1617
        %v1619 = vmul.f32 %v1617, %v1618
        %v1620 = vsub.f32 1.0, %v1619
        %v1621 = vmul.f32 %v1618, %v1620
        %v1622 = vadd.f32 %v1618, %v1621
        %vm1623 = vweird.f32 %v1617
        %vm1624 = vweird.f32 %v1618
        %vm1625 = vmor %vm1623, %vm1624
        %v1626 = vsel %vm1625, %v1618, %v1622
        %v1627 = vand.u32 2147483647, %v1617
        %vm1628 = vcmp.eq.f32.partialorder %v1627, 8.507059e+37
        %v1629 = vand.u32 %v1617, 2147483648
        %v1630 = vor.u32 1.1754944e-38, %v1629
        %v1631 = vsel %vm1628, %v1630, %v1626
        %v1632 = vmul.f32 1.0, %v1631
        %v1633 = vmul.f32 %v1612, %v1510
        %v1634 = vmul.f32 %v1593, %v1613
        %v1635 = vadd.f32 %v1633, %v1634
        %v1636 = vtanh.pop %v1635
        %v1637 = vmul.f32 %v1632, %v1636
        %s1638 = scalar_lea.vmem [#allocation2], 224
        %v1639 = vld [vmem:[%s1638] sm:$0xff]
        %v1640 = vld [vmem:[%s1638 + $0x8] sm:$0xff]
        %v1641 = vld [vmem:[%s1638 + $0x10] sm:$0xff]
        %v1642 = vld [vmem:[%s1638 + $0x18] sm:$0xff]
        %v1643 = vpack.c.bf16 %v1637, %v1637
        %1644 = vmatpush.bf16.msra.mxu0 %v733
        %1645 = vmatpush.bf16.msra.mxu0 %v729
        %1646 = vmatpush.bf16.msra.mxu0 %v725
        %1647 = vmatpush.bf16.msra.mxu0 %v721
        %1648 = vmatpush.bf16.msra.mxu0 %v717
        %1649 = vmatpush.bf16.msra.mxu0 %v713
        %1650 = vmatpush.bf16.msra.mxu0 %v709
        %1651 = vmatpush.bf16.msra.mxu0 %v705
        %1652 = vmatmul.bf16.gmra.mxu0 %v1643
        %v1653 = vpop.f32.mrf.mxu0
        %v1654 = vadd.f32 0.0, %v1653
        %v1655 = vpop.f32.mrf.mxu0
        %1656 = vdwg.mxu0
        %1657 = vmatpush.bf16.msra.mxu0 %v734
        %1658 = vmatpush.bf16.msra.mxu0 %v730
        %1659 = vmatpush.bf16.msra.mxu0 %v726
        %1660 = vmatpush.bf16.msra.mxu0 %v722
        %1661 = vmatpush.bf16.msra.mxu0 %v718
        %1662 = vmatpush.bf16.msra.mxu0 %v714
        %1663 = vmatpush.bf16.msra.mxu0 %v710
        %1664 = vmatpush.bf16.msra.mxu0 %v706
        %1665 = vmatmul.bf16.gmra.mxu0 %v1643
        %v1666 = vpop.f32.mrf.mxu0
        %v1667 = vadd.f32 0.0, %v1666
        %v1668 = vpop.f32.mrf.mxu0
        %1669 = vdwg.mxu0
        %1670 = vmatpush.bf16.msra.mxu0 %v735
        %1671 = vmatpush.bf16.msra.mxu0 %v731
        %1672 = vmatpush.bf16.msra.mxu0 %v727
        %1673 = vmatpush.bf16.msra.mxu0 %v723
        %1674 = vmatpush.bf16.msra.mxu0 %v719
        %1675 = vmatpush.bf16.msra.mxu0 %v715
        %1676 = vmatpush.bf16.msra.mxu0 %v711
        %1677 = vmatpush.bf16.msra.mxu0 %v707
        %1678 = vmatmul.bf16.gmra.mxu0 %v1643
        %v1679 = vpop.f32.mrf.mxu0
        %v1680 = vadd.f32 0.0, %v1679
        %v1681 = vpop.f32.mrf.mxu0
        %1682 = vdwg.mxu0
        %1683 = vmatpush.bf16.msra.mxu0 %v736
        %1684 = vmatpush.bf16.msra.mxu0 %v732
        %1685 = vmatpush.bf16.msra.mxu0 %v728
        %1686 = vmatpush.bf16.msra.mxu0 %v724
        %1687 = vmatpush.bf16.msra.mxu0 %v720
        %1688 = vmatpush.bf16.msra.mxu0 %v716
        %1689 = vmatpush.bf16.msra.mxu0 %v712
        %1690 = vmatpush.bf16.msra.mxu0 %v708
        %1691 = vmatmul.bf16.gmra.mxu0 %v1643
        %v1692 = vpop.f32.mrf.mxu0
        %v1693 = vadd.f32 0.0, %v1692
        %v1694 = vpop.f32.mrf.mxu0
        %1695 = vdwg.mxu0
        %v1696 = vadd.f32 %v1639, %v1654
        %v1697 = vadd.f32 %v1640, %v1667
        %v1698 = vadd.f32 %v1641, %v1680
        %v1699 = vadd.f32 %v1642, %v1693
        %v1700 = vxor.u32 %v1696, 2147483648
        %v1701 = vmul.f32 %v1700, 1.442695
        %v1702 = vpow.pop %v1701
        %v1703 = vadd.f32 %v1702, 1.0
        %v1704 = vrcp.pop %v1703
        %v1705 = vmul.f32 %v1703, %v1704
        %v1706 = vsub.f32 1.0, %v1705
        %v1707 = vmul.f32 %v1704, %v1706
        %v1708 = vadd.f32 %v1704, %v1707
        %vm1709 = vweird.f32 %v1703
        %vm1710 = vweird.f32 %v1704
        %vm1711 = vmor %vm1709, %vm1710
        %v1712 = vsel %vm1711, %v1704, %v1708
        %v1713 = vand.u32 2147483647, %v1703
        %vm1714 = vcmp.eq.f32.partialorder %v1713, 8.507059e+37
        %v1715 = vand.u32 %v1703, 2147483648
        %v1716 = vor.u32 1.1754944e-38, %v1715
        %v1717 = vsel %vm1714, %v1716, %v1712
        %v1718 = vmul.f32 1.0, %v1717
        %v1719 = vxor.u32 %v1697, 2147483648
        %v1720 = vmul.f32 %v1719, 1.442695
        %v1721 = vpow.pop %v1720
        %v1722 = vadd.f32 %v1721, 1.0
        %v1723 = vrcp.pop %v1722
        %v1724 = vmul.f32 %v1722, %v1723
        %v1725 = vsub.f32 1.0, %v1724
        %v1726 = vmul.f32 %v1723, %v1725
        %v1727 = vadd.f32 %v1723, %v1726
        %vm1728 = vweird.f32 %v1722
        %vm1729 = vweird.f32 %v1723
        %vm1730 = vmor %vm1728, %vm1729
        %v1731 = vsel %vm1730, %v1723, %v1727
        %v1732 = vand.u32 2147483647, %v1722
        %vm1733 = vcmp.eq.f32.partialorder %v1732, 8.507059e+37
        %v1734 = vand.u32 %v1722, 2147483648
        %v1735 = vor.u32 1.1754944e-38, %v1734
        %v1736 = vsel %vm1733, %v1735, %v1731
        %v1737 = vmul.f32 1.0, %v1736
        %v1738 = vtanh.pop %v1698
        %v1739 = vxor.u32 %v1699, 2147483648
        %v1740 = vmul.f32 %v1739, 1.442695
        %v1741 = vpow.pop %v1740
        %v1742 = vadd.f32 %v1741, 1.0
        %v1743 = vrcp.pop %v1742
        %v1744 = vmul.f32 %v1742, %v1743
        %v1745 = vsub.f32 1.0, %v1744
        %v1746 = vmul.f32 %v1743, %v1745
        %v1747 = vadd.f32 %v1743, %v1746
        %vm1748 = vweird.f32 %v1742
        %vm1749 = vweird.f32 %v1743
        %vm1750 = vmor %vm1748, %vm1749
        %v1751 = vsel %vm1750, %v1743, %v1747
        %v1752 = vand.u32 2147483647, %v1742
        %vm1753 = vcmp.eq.f32.partialorder %v1752, 8.507059e+37
        %v1754 = vand.u32 %v1742, 2147483648
        %v1755 = vor.u32 1.1754944e-38, %v1754
        %v1756 = vsel %vm1753, %v1755, %v1751
        %v1757 = vmul.f32 1.0, %v1756
        %v1758 = vmul.f32 %v1737, %v1635
        %v1759 = vmul.f32 %v1718, %v1738
        %v1760 = vadd.f32 %v1758, %v1759
        %v1761 = vtanh.pop %v1760
        %v1762 = vmul.f32 %v1757, %v1761
        %1763 = vst [vmem:[#allocation3] sm:$0xff] %v1762
        %1764 = vst [vmem:[#allocation4] sm:$0xff] %v1760
        %p1765 = scmp.eq.s32.totalorder %s19, 2
        // Predicated region
        $region53: #{tpu_custom_call.1} parent=43 // pred_check
          %p1766 = pneg %p1765
        $region54: #{tpu_custom_call.1} parent=43 // pred_check_branch
          %1768 = sbr.rel (%p1766) target = $region56
        $region55: #{tpu_custom_call.1} parent=43 // pred_region
          %v1769 = vpack.c.bf16 %v1762, %v1762
          %v1770 = vld [vmem:[%s4] sm:$0xf]
          %v1771 = vld [vmem:[%s4 + $0x4] sm:$0xf]
          %v1772 = vld [vmem:[%s4 + $0x8] sm:$0xf]
          %v1773 = vld [vmem:[%s4 + $0xc] sm:$0xf]
          %v1774 = vld [vmem:[%s4 + $0x10] sm:$0xf]
          %v1775 = vld [vmem:[%s4 + $0x14] sm:$0xf]
          %v1776 = vld [vmem:[%s4 + $0x18] sm:$0xf]
          %v1777 = vld [vmem:[%s4 + $0x1c] sm:$0xf]
          %v1778 = vld [vmem:[%s4 + $0x20] sm:$0xf]
          %v1779 = vld [vmem:[%s4 + $0x24] sm:$0xf]
          %v1780 = vld [vmem:[%s4 + $0x28] sm:$0xf]
          %v1781 = vld [vmem:[%s4 + $0x2c] sm:$0xf]
          %v1782 = vld [vmem:[%s4 + $0x30] sm:$0xf]
          %v1783 = vld [vmem:[%s4 + $0x34] sm:$0xf]
          %v1784 = vld [vmem:[%s4 + $0x38] sm:$0xf]
          %v1785 = vld [vmem:[%s4 + $0x3c] sm:$0xf]
          %v1786 = vld [vmem:[%s5] sm:$0x1]
          %v1788 = vperm.slane %v1786, 0
          %v1806 = vunpack.c.l.b16 %v1770
          %v1807 = vunpack.c.l.b16 %v1771
          %v1808 = vunpack.c.l.b16 %v1772
          %v1809 = vunpack.c.l.b16 %v1773
          %v1810 = vunpack.c.l.b16 %v1774
          %v1811 = vunpack.c.l.b16 %v1775
          %v1812 = vunpack.c.l.b16 %v1776
          %v1813 = vunpack.c.l.b16 %v1777
          %v1814 = vunpack.c.l.b16 %v1778
          %v1815 = vunpack.c.l.b16 %v1779
          %v1816 = vunpack.c.l.b16 %v1780
          %v1817 = vunpack.c.l.b16 %v1781
          %v1818 = vunpack.c.l.b16 %v1782
          %v1819 = vunpack.c.l.b16 %v1783
          %v1820 = vunpack.c.l.b16 %v1784
          %v1821 = vunpack.c.l.b16 %v1785
          %v1822 = vpack.c.b16 %v1807, %v1806
          %v1823 = vpack.c.b16 %v1809, %v1808
          %v1824 = vpack.c.b16 %v1811, %v1810
          %v1825 = vpack.c.b16 %v1813, %v1812
          %v1826 = vpack.c.b16 %v1815, %v1814
          %v1827 = vpack.c.b16 %v1817, %v1816
          %v1828 = vpack.c.b16 %v1819, %v1818
          %v1829 = vpack.c.b16 %v1821, %v1820
          %1838 = vmatpush.bf16.msra.mxu0 %v1829
          %1839 = vmatpush.bf16.msra.mxu0 %v1828
          %1840 = vmatpush.bf16.msra.mxu0 %v1827
          %1841 = vmatpush.bf16.msra.mxu0 %v1826
          %1842 = vmatpush.bf16.msra.mxu0 %v1825
          %1843 = vmatpush.bf16.msra.mxu0 %v1824
          %1844 = vmatpush.bf16.msra.mxu0 %v1823
          %1845 = vmatpush.bf16.msra.mxu0 %v1822
          %1846 = vmatmul.bf16.gmra.mxu0 %v1769
          %v1847 = vpop.f32.mrf.mxu0
          %v1848 = vadd.f32 %v1788, %v1847
          %v1849 = vpop.f32.mrf.mxu0
          %1850 = vdwg.mxu0
          %1851 = vmax.xlane.f32.xlu0 %v1848
          %v1852 = vpop.xlane.xlu0 %1851
          %v1853 = vsub.f32 %v1848, %v1852
          %v1854 = vmul.f32 %v1853, 1.442695
          %v1855 = vpow.pop %v1854
          %1856 = vadd.xlane.f32.xlu0 %v1855
          %v1857 = vpop.xlane.xlu0 %1856
          %v1858 = vlog2.pop %v1857
          %v1859 = vmul.f32 %v1858, 0.6931472
          %v1860 = vsub.f32 %v1853, %v1859
          %1861 = vst [vmem:[#allocation8] sm:$0xff] %v1860
        $region56: #{tpu_custom_call.1} parent=43 // pred_fallthru
          _
        // Predicated region
        $region57: #{tpu_custom_call.1} parent=43 // pred_check
          %p1862 = pneg %p163
        $region58: #{tpu_custom_call.1} parent=43 // pred_check_branch
          %1864 = sbr.rel (%p1862) target = $region60
        $region59: #{tpu_custom_call.1} parent=43 // pred_region
          %1866 = vsyncadd [#allocation7], 0
          %s1868 = sshll.u32 [#allocation8], 4
          %s1869 = int_to_ptr.vmem [resolvable:$true] %s1868
          %s1870 = sshll.u32 %s6, 4
          %s1871 = int_to_ptr.hbm [resolvable:$true] %s1870
          %1873 = dma.vmem_to_hbm [thread:$0]  %s1869, 128, %s1871, [#allocation7]
        $region60: #{tpu_custom_call.1} parent=43 // pred_fallthru
          _
        // Predicated region
        $region61: #{tpu_custom_call.1} parent=43 // pred_check
          %p1874 = pneg %p163
        $region62: #{tpu_custom_call.1} parent=43 // pred_check_branch
          %1876 = sbr.rel (%p1874) target = $region64
        $region63: #{tpu_custom_call.1} parent=43 // pred_region
          %1878 = dma.done [#allocation7], 128
        $region64: #{tpu_custom_call.1} parent=43 // pred_fallthru
          _
      $region44: #{tpu_custom_call.1} parent=5 // pred_fallthru
        _
      %p1879 = scmp.le.s32.totalorder 2, %s14
      // Predicated region
      $region65: #{tpu_custom_call.1} parent=5 // pred_check
        %p1880 = pneg %p1879
      $region66: #{tpu_custom_call.1} parent=5 // pred_check_branch
        %1882 = sbr.rel (%p1880) target = $region68
      $region67: #{tpu_custom_call.1} parent=5 // pred_region
        %s1883 = ssub.s32 %s14, 2
      $region68: #{tpu_custom_call.1} parent=5 // pred_fallthru
        _
    $region6: #{tpu_custom_call.1} parent=1 // loop_footer
      %s18 = sadd.s32 1, %s14
    $region7: #{tpu_custom_call.1} parent=1 // loop_footer_branch
      %13 = sbr.rel target = $region3
    $region8: #{tpu_custom_call.1} parent=1 // loop_exit
      _
    %1884 = vsyncpa [#allocation6], 1
    %s1885 = scalar_lea.sflag [#allocation6], 1
    %1886 = vsyncpa %s1885, 1
    %1887 = vsyncpa [#allocation7], 1
    %s1888 = scalar_lea.sflag [#allocation7], 1
    %1889 = vsyncpa %s1888, 1

</llo_original>
